<compile_context>
chip_gen: v6e
topology: v6e:2x2x1
jax: 0.10.0
libtpu: 0.0.40
codegen_flags: <defaults>
</compile_context>

<pallas_src>
import functools

import jax
import jax.numpy as jnp
from jax.experimental import pallas as pl
from jax.experimental.pallas import tpu as pltpu

EMBED_DIM = 32     # TokenAndPositionEmbedding embed_dim
VOCAB = 6
CONV_CH = 64       # hidden channels of the conv-residual feature blocks
KSIZE = 3          # conv kernel size

ACT_NONE, ACT_GELU, ACT_RELU, ACT_SIGMOID, ACT_SILU = 0, 1, 2, 3, 4


def _round_up(x, m):
    return ((x + m - 1) // m) * m


def _batch_tile(b):
    """Largest batch tile dividing b while leaving >= 2 grid steps (v7x: 2 TCs)."""
    for tb in (8, 4, 2):
        if b % tb == 0 and b // tb >= 2:
            return tb
    return 1


# --------------------------------------------------------------------------
# Pallas kernels
# --------------------------------------------------------------------------

def _im2col3(x):
    """[shift(+1); x; shift(-1)] stacked along the channel axis (k=3 conv).

    `x` is (C, N) with every padded column already zeroed, so the XLU lane
    rotation wraparound injects exactly the zeros a same-padded conv would see
    at the sequence boundaries (Lpad > L guarantees the wrapped column is a
    zeroed one).  Avoids misaligned lane slices inside the kernel.
    """
    n = x.shape[-1]
    return jnp.concatenate(
        [pltpu.roll(x, 1, 1), x, pltpu.roll(x, n - 1, 1)], axis=0)


def _conv_block_tail(h1, valid, w2, b2, w3, b3):
    """Residual conv (64->64, k=3) + final conv (64->1, k=3) of one block.

    h1: (64, N) f32, already valid-masked and resident in VMEM/vregs.
    The 1-channel final conv is a VPU weighted reduction (not a 1-row matmul).
    """
    h1col = _im2col3(h1).astype(jnp.bfloat16)                     # (192, N)
    h2 = jnp.dot(w2, h1col, preferred_element_type=jnp.float32)   # (64, N)
    h2 = (jnp.tanh(h2 + b2) + h1) * valid                         # residual + mask
    h2col = _im2col3(h2)                                          # (192, N) f32
    feat = jnp.sum(w3 * h2col, axis=0, keepdims=True) + b3        # (1, N)
    return jnp.tanh(feat)


def _seg_group_kernel(emb_ref, vmask_ref, w1_ref, b1_ref, w2_ref, b2_ref,
                      w3_ref, b3_ref, out_ref, *, num_blocks):
    """meta/v/d/j segmentation feature blocks fused into one kernel.

    conv1 of all blocks is one stacked (num_blocks*64, 96) matmul; conv2/conv3
    run per block on VMEM-resident intermediates (no HBM round trips).
    """
    valid = vmask_ref[...]                                        # (1, N) f32
    x = emb_ref[...].astype(jnp.float32)                          # (32, N)
    xcol = _im2col3(x).astype(jnp.bfloat16)                       # (96, N)
    h1 = jnp.dot(w1_ref[...], xcol, preferred_element_type=jnp.float32)
    h1 = jnp.tanh(h1 + b1_ref[...]) * valid                       # (nb*64, N)
    for g in range(num_blocks):                                   # static unroll
        sl = slice(CONV_CH * g, CONV_CH * (g + 1))
        out_ref[g:g + 1, :] = _conv_block_tail(
            h1[sl, :], valid, w2_ref[sl, :], b2_ref[sl, :],
            w3_ref[g], b3_ref[g])


def _cls_group_kernel(emb_ref, gate_ref, vmask_ref, w1_ref, b1_ref, w2_ref,
                      b2_ref, w3_ref, b3_ref, out_ref, *, num_blocks):
    """v/d/j classification blocks with the cutout Hadamard gate fused into
    conv1: embeddings are read from HBM once for all three genes and the
    masked copies never touch HBM."""
    valid = vmask_ref[...]                                        # (1, N)
    emb = emb_ref[...].astype(jnp.float32)                        # (32, N)
    for g in range(num_blocks):                                   # static unroll
        sl = slice(CONV_CH * g, CONV_CH * (g + 1))
        x = emb * gate_ref[g:g + 1, :]                            # mask_gate fused
        xcol = _im2col3(x).astype(jnp.bfloat16)
        h1 = jnp.dot(w1_ref[sl, :], xcol, preferred_element_type=jnp.float32)
        h1 = jnp.tanh(h1 + b1_ref[sl, :]) * valid
        out_ref[g:g + 1, :] = _conv_block_tail(
            h1, valid, w2_ref[sl, :], b2_ref[sl, :], w3_ref[g], b3_ref[g])


def _fused_heads_kernel(x_ref, w_ref, b_ref, act_ref, o_ref):
    """One wide lane-dense matmul for many small Dense heads; activation is
    selected per output column from an id vector (EUP transcendentals)."""
    y = jnp.dot(x_ref[...], w_ref[...], preferred_element_type=jnp.float32)
    y = y + b_ref[...]
    aid = act_ref[...]                                            # (1, Fout) int32
    out = jnp.where(aid == ACT_GELU, jax.nn.gelu(y, approximate=True), y)
    out = jnp.where(aid == ACT_RELU, jnp.maximum(y, 0.0), out)
    out = jnp.where(aid == ACT_SIGMOID, jax.nn.sigmoid(y), out)
    out = jnp.where(aid == ACT_SILU, y * jax.nn.sigmoid(y), out)
    o_ref[...] = out


# --------------------------------------------------------------------------
# pallas_call wrappers
# --------------------------------------------------------------------------

def conv_feature_group(emb_flat, vmask, blk, *, batch, lpad, tb, gates=None):
    """Fused conv-residual feature extraction for a group of parallel blocks.

    emb_flat: (32, B*Lpad) bf16 channel-major embeddings, zero beyond L.
    vmask:    (1, B*Lpad) f32 validity mask.
    gates:    optional (G, B*Lpad) f32 per-block cutout gate.
    Returns (G, B*Lpad) f32 features (valid in columns l < L of each chunk).
    """
    num_blocks = blk["w3"].shape[0]
    n = tb * lpad

    def col_spec(rows):
        return pl.BlockSpec((rows, n), lambda i: (0, i))

    def full_spec(arr):
        nd = arr.ndim
        return pl.BlockSpec(arr.shape, lambda i, _nd=nd: (0,) * _nd)

    in_specs = [col_spec(EMBED_DIM)]
    args = [emb_flat]
    if gates is not None:
        in_specs.append(col_spec(num_blocks))
        args.append(gates)
        kernel = functools.partial(_cls_group_kernel, num_blocks=num_blocks)
    else:
        kernel = functools.partial(_seg_group_kernel, num_blocks=num_blocks)
    in_specs += [col_spec(1), full_spec(blk["w1"]), full_spec(blk["b1"]),
                 full_spec(blk["w2"]), full_spec(blk["b2"]),
                 full_spec(blk["w3"]), full_spec(blk["b3"])]
    args += [vmask, blk["w1"], blk["b1"], blk["w2"], blk["b2"],
             blk["w3"], blk["b3"]]

    return pl.pallas_call(
        kernel,
        grid=(batch // tb,),
        in_specs=in_specs,
        out_specs=col_spec(num_blocks),
        out_shape=jax.ShapeDtypeStruct((num_blocks, batch * lpad), jnp.float32),
        compiler_params=pltpu.CompilerParams(
            dimension_semantics=("parallel",)),
    )(*args)


def fused_heads(x, head):
    """x: (B, Fin) -> (B, Fout) with per-column activation."""
    bsz = x.shape[0]
    fout = head["w"].shape[1]
    return pl.pallas_call(
        _fused_heads_kernel,
        out_shape=jax.ShapeDtypeStruct((bsz, fout), jnp.float32),
    )(x.astype(jnp.bfloat16), head["w"], head["b"], head["act"])


# --------------------------------------------------------------------------
# Parameter construction (deterministic, synthetic)
# --------------------------------------------------------------------------

def init_params(key, L, v_n, d_n, j_n):
    lpad = _round_up(L, 128)
    if lpad == L:                       # always keep >= 1 zero column of padding
        lpad += 128
    keys = iter(jax.random.split(key, 64))

    def nrm(shape, s=0.1):
        return s * jax.random.normal(next(keys), shape, jnp.float32)

    def xavier(fi, fo):
        return ((2.0 / (fi + fo)) ** 0.5) * jax.random.normal(
            next(keys), (fi, fo), jnp.float32)

    params = {
        "Lpad": lpad,
        "allele_counts": (v_n, d_n, j_n),
        "tok_emb": nrm((VOCAB, EMBED_DIM)),
        "pos_emb": nrm((L, EMBED_DIM)),
    }

    # TODO(synk): exact ConvResidualFeatureExtractionBlock architecture not
    # provided; approximated as conv(32->64) -> residual conv(64->64) ->
    # conv(64->1), tanh activations, same padding.  Weights are stored in a
    # stacked im2col layout (C_out, K*C_in), matmul inputs in bf16.
    def conv_group(g):
        return {
            "w1": nrm((g * CONV_CH, KSIZE * EMBED_DIM)).astype(jnp.bfloat16),
            "b1": jnp.zeros((g * CONV_CH, 1), jnp.float32),
            "w2": nrm((g * CONV_CH, KSIZE * CONV_CH)).astype(jnp.bfloat16),
            "b2": jnp.zeros((g * CONV_CH, 1), jnp.float32),
            "w3": nrm((g, KSIZE * CONV_CH, 1)),
            "b3": jnp.zeros((g, 1, 1), jnp.float32),
        }

    params["seg_blocks"] = conv_group(4)      # [meta, v_seg, d_seg, j_seg]
    params["cls_blocks"] = conv_group(3)      # [v_cls, d_cls, j_cls]

    # ---- fused head pass 1: inputs [meta | v_seg | d_seg | j_seg] (4L) ------
    f1_in, f1_out = 4 * L, _round_up(7 + 2 * L, 128)
    w1 = jnp.zeros((f1_in, f1_out), jnp.float32)
    a1 = jnp.zeros((f1_out,), jnp.int32)
    seg_rows = {"v": slice(L, 2 * L), "d": slice(2 * L, 3 * L),
                "j": slice(3 * L, 4 * L)}
    col = 0
    for gene in ("v", "d", "j"):             # start / end (StartEndOutputNode, gelu)
        for _ in range(2):
            w1 = w1.at[seg_rows[gene], col].set(xavier(L, 1)[:, 0])
            a1 = a1.at[col].set(ACT_GELU)
            col += 1
    w1 = w1.at[0:L, col].set(xavier(L, 1)[:, 0])        # productivity head (sigmoid)
    a1 = a1.at[col].set(ACT_SIGMOID)
    col += 1
    w1 = w1.at[0:L, col:col + L].set(xavier(L, L))      # mutation_rate_mid (linear)
    col += L
    w1 = w1.at[0:L, col:col + L].set(xavier(L, L))      # indel_count_mid (linear)
    params["heads1"] = {"w": w1.astype(jnp.bfloat16),
                        "b": jnp.zeros((1, f1_out), jnp.float32),
                        "act": a1[None, :]}

    # ---- fused head pass 2: [mut_mid | ind_mid | v_feat | d_feat | j_feat] --
    latent = 2 * L                                       # latent_size_factor = 2
    f2_in, f2_out = 5 * L, _round_up(2 + 3 * latent, 128)
    w2 = jnp.zeros((f2_in, f2_out), jnp.float32)
    a2 = jnp.zeros((f2_out,), jnp.int32)
    w2 = w2.at[0:L, 0].set(xavier(L, 1)[:, 0])           # mutation rate head (relu)
    a2 = a2.at[0].set(ACT_RELU)
    w2 = w2.at[L:2 * L, 1].set(xavier(L, 1)[:, 0])       # indel count head (relu)
    a2 = a2.at[1].set(ACT_RELU)
    col = 2
    for gi in range(3):                                  # allele mid layers (silu)
        rows = slice((2 + gi) * L, (3 + gi) * L)
        w2 = w2.at[rows, col:col + latent].set(xavier(L, latent))
        a2 = a2.at[col:col + latent].set(ACT_SILU)
        col += latent
    params["heads2"] = {"w": w2.astype(jnp.bfloat16),
                        "b": jnp.zeros((1, f2_out), jnp.float32),
                        "act": a2[None, :]}

    # ---- fused head pass 3: [v_mid | d_mid | j_mid] -> allele logits --------
    f3_in, f3_out = 3 * latent, _round_up(v_n + d_n + j_n, 128)
    w3 = jnp.zeros((f3_in, f3_out), jnp.float32)
    a3 = jnp.zeros((f3_out,), jnp.int32)
    col = 0
    for gi, n_out in enumerate((v_n, d_n, j_n)):
        rows = slice(gi * latent, (gi + 1) * latent)
        w3 = w3.at[rows, col:col + n_out].set(xavier(latent, n_out))
        a3 = a3.at[col:col + n_out].set(ACT_SIGMOID)
        col += n_out
    params["heads3"] = {"w": w3.astype(jnp.bfloat16),
                        "b": jnp.zeros((1, f3_out), jnp.float32),
                        "act": a3[None, :]}
    return params


# --------------------------------------------------------------------------
# Forward pass
# --------------------------------------------------------------------------

def heavy_chain_alignair_forward(params, tokens):
    B, L = tokens.shape
    lpad = params["Lpad"]
    tb = _batch_tile(B)

    # ---- glue: token + position embedding, channel-major padded layout -----
    emb = params["tok_emb"][tokens] + params["pos_emb"][None]      # (B, L, 32)
    emb = jnp.transpose(emb, (2, 0, 1))                            # (32, B, L)
    emb = jnp.pad(emb, ((0, 0), (0, 0), (0, lpad - L)))            # (32, B, Lpad)
    emb_flat = emb.reshape(EMBED_DIM, B * lpad).astype(jnp.bfloat16)
    vmask = jnp.tile((jnp.arange(lpad) < L).astype(jnp.float32), B)[None, :]

    # ---- fused segmentation features: meta, v, d, j in ONE kernel -----------
    seg = conv_feature_group(emb_flat, vmask, params["seg_blocks"],
                             batch=B, lpad=lpad, tb=tb)
    seg = seg.reshape(4, B, lpad)[:, :, :L]                        # [meta, v, d, j]

    # ---- fused dense heads, pass 1 ------------------------------------------
    x1 = jnp.transpose(seg, (1, 0, 2)).reshape(B, 4 * L)
    out1 = fused_heads(x1, params["heads1"])
    v_start, v_end = out1[:, 0:1], out1[:, 1:2]
    d_start, d_end = out1[:, 2:3], out1[:, 3:4]
    j_start, j_end = out1[:, 4:5], out1[:, 5:6]
    is_productive = out1[:, 6:7]
    mut_mid = out1[:, 7:7 + L]
    ind_mid = out1[:, 7 + L:7 + 2 * L]

    # ---- cutout windows (tiny glue; gating itself is fused into the kernel) -
    # TODO(synk): CutoutLayer source not provided; soft sigmoid window used.
    pos = jnp.arange(lpad, dtype=jnp.float32)[None, :]

    def window(s, e):
        return (jax.nn.sigmoid(pos - s) - jax.nn.sigmoid(pos - e)).reshape(-1)

    gates = jnp.stack([window(v_start, v_end),
                       window(d_start, d_end),
                       window(j_start, j_end)], axis=0)            # (3, B*Lpad)

    # ---- fused classification features (cutout gate fused into conv1) ------
    cls = conv_feature_group(emb_flat, vmask, params["cls_blocks"],
                             batch=B, lpad=lpad, tb=tb, gates=gates)
    cls = cls.reshape(3, B, lpad)[:, :, :L]                        # [v, d, j]

    # ---- fused dense heads, pass 2 ------------------------------------------
    x2 = jnp.concatenate([mut_mid, ind_mid, cls[0], cls[1], cls[2]], axis=-1)
    out2 = fused_heads(x2, params["heads2"])
    mutation_rate = out2[:, 0:1]
    indel_count = out2[:, 1:2]
    latent = 2 * L
    v_mid = out2[:, 2:2 + latent]
    d_mid = out2[:, 2 + latent:2 + 2 * latent]
    j_mid = out2[:, 2 + 2 * latent:2 + 3 * latent]

    # ---- fused dense heads, pass 3: allele outputs --------------------------
    x3 = jnp.concatenate([v_mid, d_mid, j_mid], axis=-1)
    out3 = fused_heads(x3, params["heads3"])
    vn, dn, jn = params["allele_counts"]
    v_allele = out3[:, :vn]
    d_allele = out3[:, vn:vn + dn]
    j_allele = out3[:, vn + dn:vn + dn + jn]

    return {
        "v_start": v_start, "v_end": v_end,
        "d_start": d_start, "d_end": d_end,
        "j_start": j_start, "j_end": j_end,
        "v_allele": v_allele, "d_allele": d_allele, "j_allele": j_allele,
        "mutation_rate": mutation_rate,
        "indel_count": indel_count,
        "productive": is_productive,
    }


# --------------------------------------------------------------------------
# Main
# --------------------------------------------------------------------------

if __name__ == "__main__":
    max_seq_length = 64       # stands in for 576 in the real model
    v_allele_count = 8
    d_allele_count = 4
    j_allele_count = 4
    batch = 2

    key = jax.random.PRNGKey(0)
    k_params, k_tokens = jax.random.split(key)
    params = init_params(k_params, max_seq_length,
                         v_allele_count, d_allele_count, j_allele_count)
    tokens = jax.random.randint(k_tokens, (batch, max_seq_length), 0, VOCAB,
                                dtype=jnp.int32)

    out = heavy_chain_alignair_forward(params, tokens)
    out = jax.tree_util.tree_map(jax.block_until_ready, out)

    # light sanity checks
    assert out["v_start"].shape == (batch, 1)
    assert out["j_end"].shape == (batch, 1)
    assert out["v_allele"].shape == (batch, v_allele_count)
    assert out["d_allele"].shape == (batch, d_allele_count)
    assert out["j_allele"].shape == (batch, j_allele_count)
    assert out["mutation_rate"].shape == (batch, 1)
    assert out["indel_count"].shape == (batch, 1)
    assert out["productive"].shape == (batch, 1)
    assert bool(jnp.all(jnp.isfinite(out["v_allele"])))
    assert bool(jnp.all(jnp.isfinite(out["mutation_rate"])))

    print("KERNEL_OK")
</pallas_src>

<mosaic_0001>
module attributes {stable_mosaic.version = 11 : i64} {
  func.func @_seg_group_kernel(%arg0: i32, %arg1: memref<32x128xbf16, #tpu.memory_space<vmem>>, %arg2: memref<1x128xf32, #tpu.memory_space<vmem>>, %arg3: memref<256x96xbf16, #tpu.memory_space<vmem>>, %arg4: memref<256x1xf32, #tpu.memory_space<vmem>>, %arg5: memref<256x192xbf16, #tpu.memory_space<vmem>>, %arg6: memref<256x1xf32, #tpu.memory_space<vmem>>, %arg7: memref<4x192x1xf32, #tpu.memory_space<vmem>>, %arg8: memref<4x1x1xf32, #tpu.memory_space<vmem>>, %arg9: memref<4x128xf32, #tpu.memory_space<vmem>>) attributes {dimension_semantics = [#tpu.dimension_semantics<parallel>], iteration_bounds = array<i64: 2>, scalar_prefetch = 0 : i64, scratch_operands = 0 : i64, tpu.core_type = #tpu.core_type<tc>, window_params = [{transform_indices = @transform_0, window_bounds = array<i64: 32, 128>}, {transform_indices = @transform_1, window_bounds = array<i64: 1, 128>}, {pipeline_mode = #tpu.pipeline_mode<synchronous>, transform_indices = @transform_2, window_bounds = array<i64: 256, 96>}, {pipeline_mode = #tpu.pipeline_mode<synchronous>, transform_indices = @transform_3, window_bounds = array<i64: 256, 1>}, {pipeline_mode = #tpu.pipeline_mode<synchronous>, transform_indices = @transform_4, window_bounds = array<i64: 256, 192>}, {pipeline_mode = #tpu.pipeline_mode<synchronous>, transform_indices = @transform_5, window_bounds = array<i64: 256, 1>}, {pipeline_mode = #tpu.pipeline_mode<synchronous>, transform_indices = @transform_6, window_bounds = array<i64: 4, 192, 1>}, {pipeline_mode = #tpu.pipeline_mode<synchronous>, transform_indices = @transform_7, window_bounds = array<i64: 4, 1, 1>}, {transform_indices = @transform_8, window_bounds = array<i64: 4, 128>}]} {
    %c0 = arith.constant 0 : index
    %c0_0 = arith.constant 0 : index
    %0 = vector.load %arg2[%c0, %c0_0] : memref<1x128xf32, #tpu.memory_space<vmem>>, vector<1x128xf32>
    %c0_1 = arith.constant 0 : index
    %c0_2 = arith.constant 0 : index
    %1 = vector.load %arg1[%c0_1, %c0_2] : memref<32x128xbf16, #tpu.memory_space<vmem>>, vector<32x128xbf16>
    %2 = arith.extf %1 : vector<32x128xbf16> to vector<32x128xf32>
    %c1_i32 = arith.constant 1 : i32
    %3 = tpu.dynamic_rotate %2 by %c1_i32 dim 1 : vector<32x128xf32>, i32 -> vector<32x128xf32>
    %c127_i32 = arith.constant 127 : i32
    %4 = tpu.dynamic_rotate %2 by %c127_i32 dim 1 : vector<32x128xf32>, i32 -> vector<32x128xf32>
    %5 = tpu.concatenate %3, %2, %4 in 0 : vector<32x128xf32>, vector<32x128xf32>, vector<32x128xf32> -> vector<96x128xf32>
    %6 = arith.truncf %5 : vector<96x128xf32> to vector<96x128xbf16>
    %c0_3 = arith.constant 0 : index
    %c0_4 = arith.constant 0 : index
    %7 = vector.load %arg3[%c0_3, %c0_4] : memref<256x96xbf16, #tpu.memory_space<vmem>>, vector<256x96xbf16>
    %cst = arith.constant dense<0.000000e+00> : vector<256x128xf32>
    %8 = tpu.matmul %7, %6, %cst {dimension_numbers = #tpu.dot_dimension_numbers<[1], [0], [0], [1], [0, 0, 1, 1], [], []>} : vector<256x96xbf16>, vector<96x128xbf16>, vector<256x128xf32> -> vector<256x128xf32>
    %c0_5 = arith.constant 0 : index
    %c0_6 = arith.constant 0 : index
    %9 = vector.load %arg4[%c0_5, %c0_6] : memref<256x1xf32, #tpu.memory_space<vmem>>, vector<256x1xf32>
    %10 = vector.broadcast %9 : vector<256x1xf32> to vector<256x128xf32>
    %11 = arith.addf %8, %10 : vector<256x128xf32>
    %12 = math.tanh %11 : vector<256x128xf32>
    %13 = vector.broadcast %0 : vector<1x128xf32> to vector<256x128xf32>
    %14 = arith.mulf %12, %13 : vector<256x128xf32>
    %15 = vector.extract_strided_slice %14 {offsets = [0, 0], sizes = [64, 128], strides = [1, 1]} : vector<256x128xf32> to vector<64x128xf32>
    %c0_7 = arith.constant 0 : index
    %c0_8 = arith.constant 0 : index
    %16 = vector.load %arg5[%c0_7, %c0_8] : memref<256x192xbf16, #tpu.memory_space<vmem>>, vector<64x192xbf16>
    %c0_9 = arith.constant 0 : index
    %c0_10 = arith.constant 0 : index
    %17 = vector.load %arg6[%c0_9, %c0_10] : memref<256x1xf32, #tpu.memory_space<vmem>>, vector<64x1xf32>
    %c0_11 = arith.constant 0 : index
    %c0_12 = arith.constant 0 : index
    %c0_13 = arith.constant 0 : index
    %18 = vector.load %arg7[%c0_11, %c0_12, %c0_13] : memref<4x192x1xf32, #tpu.memory_space<vmem>>, vector<1x192x1xf32>
    %19 = vector.shape_cast %18 : vector<1x192x1xf32> to vector<192x1xf32>
    %c0_14 = arith.constant 0 : index
    %c0_15 = arith.constant 0 : index
    %c0_16 = arith.constant 0 : index
    %20 = vector.load %arg8[%c0_14, %c0_15, %c0_16] : memref<4x1x1xf32, #tpu.memory_space<vmem>>, vector<1x1x1xf32>
    %21 = vector.shape_cast %20 : vector<1x1x1xf32> to vector<1x1xf32>
    %c1_i32_17 = arith.constant 1 : i32
    %22 = tpu.dynamic_rotate %15 by %c1_i32_17 dim 1 : vector<64x128xf32>, i32 -> vector<64x128xf32>
    %c127_i32_18 = arith.constant 127 : i32
    %23 = tpu.dynamic_rotate %15 by %c127_i32_18 dim 1 : vector<64x128xf32>, i32 -> vector<64x128xf32>
    %24 = tpu.concatenate %22, %15, %23 in 0 : vector<64x128xf32>, vector<64x128xf32>, vector<64x128xf32> -> vector<192x128xf32>
    %25 = arith.truncf %24 : vector<192x128xf32> to vector<192x128xbf16>
    %cst_19 = arith.constant dense<0.000000e+00> : vector<64x128xf32>
    %26 = tpu.matmul %16, %25, %cst_19 {dimension_numbers = #tpu.dot_dimension_numbers<[1], [0], [0], [1], [0, 0, 1, 1], [], []>} : vector<64x192xbf16>, vector<192x128xbf16>, vector<64x128xf32> -> vector<64x128xf32>
    %27 = vector.broadcast %17 : vector<64x1xf32> to vector<64x128xf32>
    %28 = arith.addf %26, %27 : vector<64x128xf32>
    %29 = math.tanh %28 : vector<64x128xf32>
    %30 = arith.addf %29, %15 : vector<64x128xf32>
    %31 = vector.broadcast %0 : vector<1x128xf32> to vector<64x128xf32>
    %32 = arith.mulf %30, %31 : vector<64x128xf32>
    %c1_i32_20 = arith.constant 1 : i32
    %33 = tpu.dynamic_rotate %32 by %c1_i32_20 dim 1 : vector<64x128xf32>, i32 -> vector<64x128xf32>
    %c127_i32_21 = arith.constant 127 : i32
    %34 = tpu.dynamic_rotate %32 by %c127_i32_21 dim 1 : vector<64x128xf32>, i32 -> vector<64x128xf32>
    %35 = tpu.concatenate %33, %32, %34 in 0 : vector<64x128xf32>, vector<64x128xf32>, vector<64x128xf32> -> vector<192x128xf32>
    %36 = vector.broadcast %19 : vector<192x1xf32> to vector<192x128xf32>
    %37 = arith.mulf %36, %35 : vector<192x128xf32>
    %cst_22 = arith.constant dense<0.000000e+00> : vector<128xf32>
    %38 = vector.multi_reduction <add>, %37, %cst_22 [0] : vector<192x128xf32> to vector<128xf32>
    %39 = vector.shape_cast %38 : vector<128xf32> to vector<1x128xf32>
    %40 = vector.broadcast %21 : vector<1x1xf32> to vector<1x128xf32>
    %41 = arith.addf %39, %40 : vector<1x128xf32>
    %42 = math.tanh %41 : vector<1x128xf32>
    %c0_23 = arith.constant 0 : index
    %c0_24 = arith.constant 0 : index
    %43 = vector.load %arg9[%c0_23, %c0_24] : memref<4x128xf32, #tpu.memory_space<vmem>>, vector<1x128xf32>
    tpu.vector_store %arg9[%c0_23, %c0_24], %42 {strides = array<i32>} : memref<4x128xf32, #tpu.memory_space<vmem>>, vector<1x128xf32>,
    %44 = vector.extract_strided_slice %14 {offsets = [64, 0], sizes = [64, 128], strides = [1, 1]} : vector<256x128xf32> to vector<64x128xf32>
    %c64 = arith.constant 64 : index
    %c0_25 = arith.constant 0 : index
    %45 = vector.load %arg5[%c64, %c0_25] : memref<256x192xbf16, #tpu.memory_space<vmem>>, vector<64x192xbf16>
    %c64_26 = arith.constant 64 : index
    %c0_27 = arith.constant 0 : index
    %46 = vector.load %arg6[%c64_26, %c0_27] : memref<256x1xf32, #tpu.memory_space<vmem>>, vector<64x1xf32>
    %c1 = arith.constant 1 : index
    %c0_28 = arith.constant 0 : index
    %c0_29 = arith.constant 0 : index
    %47 = vector.load %arg7[%c1, %c0_28, %c0_29] : memref<4x192x1xf32, #tpu.memory_space<vmem>>, vector<1x192x1xf32>
    %48 = vector.shape_cast %47 : vector<1x192x1xf32> to vector<192x1xf32>
    %c1_30 = arith.constant 1 : index
    %c0_31 = arith.constant 0 : index
    %c0_32 = arith.constant 0 : index
    %49 = vector.load %arg8[%c1_30, %c0_31, %c0_32] : memref<4x1x1xf32, #tpu.memory_space<vmem>>, vector<1x1x1xf32>
    %50 = vector.shape_cast %49 : vector<1x1x1xf32> to vector<1x1xf32>
    %c1_i32_33 = arith.constant 1 : i32
    %51 = tpu.dynamic_rotate %44 by %c1_i32_33 dim 1 : vector<64x128xf32>, i32 -> vector<64x128xf32>
    %c127_i32_34 = arith.constant 127 : i32
    %52 = tpu.dynamic_rotate %44 by %c127_i32_34 dim 1 : vector<64x128xf32>, i32 -> vector<64x128xf32>
    %53 = tpu.concatenate %51, %44, %52 in 0 : vector<64x128xf32>, vector<64x128xf32>, vector<64x128xf32> -> vector<192x128xf32>
    %54 = arith.truncf %53 : vector<192x128xf32> to vector<192x128xbf16>
    %cst_35 = arith.constant dense<0.000000e+00> : vector<64x128xf32>
    %55 = tpu.matmul %45, %54, %cst_35 {dimension_numbers = #tpu.dot_dimension_numbers<[1], [0], [0], [1], [0, 0, 1, 1], [], []>} : vector<64x192xbf16>, vector<192x128xbf16>, vector<64x128xf32> -> vector<64x128xf32>
    %56 = vector.broadcast %46 : vector<64x1xf32> to vector<64x128xf32>
    %57 = arith.addf %55, %56 : vector<64x128xf32>
    %58 = math.tanh %57 : vector<64x128xf32>
    %59 = arith.addf %58, %44 : vector<64x128xf32>
    %60 = vector.broadcast %0 : vector<1x128xf32> to vector<64x128xf32>
    %61 = arith.mulf %59, %60 : vector<64x128xf32>
    %c1_i32_36 = arith.constant 1 : i32
    %62 = tpu.dynamic_rotate %61 by %c1_i32_36 dim 1 : vector<64x128xf32>, i32 -> vector<64x128xf32>
    %c127_i32_37 = arith.constant 127 : i32
    %63 = tpu.dynamic_rotate %61 by %c127_i32_37 dim 1 : vector<64x128xf32>, i32 -> vector<64x128xf32>
    %64 = tpu.concatenate %62, %61, %63 in 0 : vector<64x128xf32>, vector<64x128xf32>, vector<64x128xf32> -> vector<192x128xf32>
    %65 = vector.broadcast %48 : vector<192x1xf32> to vector<192x128xf32>
    %66 = arith.mulf %65, %64 : vector<192x128xf32>
    %cst_38 = arith.constant dense<0.000000e+00> : vector<128xf32>
    %67 = vector.multi_reduction <add>, %66, %cst_38 [0] : vector<192x128xf32> to vector<128xf32>
    %68 = vector.shape_cast %67 : vector<128xf32> to vector<1x128xf32>
    %69 = vector.broadcast %50 : vector<1x1xf32> to vector<1x128xf32>
    %70 = arith.addf %68, %69 : vector<1x128xf32>
    %71 = math.tanh %70 : vector<1x128xf32>
    %c1_39 = arith.constant 1 : index
    %c0_40 = arith.constant 0 : index
    %72 = vector.load %arg9[%c1_39, %c0_40] : memref<4x128xf32, #tpu.memory_space<vmem>>, vector<1x128xf32>
    tpu.vector_store %arg9[%c1_39, %c0_40], %71 {strides = array<i32>} : memref<4x128xf32, #tpu.memory_space<vmem>>, vector<1x128xf32>,
    %73 = vector.extract_strided_slice %14 {offsets = [128, 0], sizes = [64, 128], strides = [1, 1]} : vector<256x128xf32> to vector<64x128xf32>
    %c128 = arith.constant 128 : index
    %c0_41 = arith.constant 0 : index
    %74 = vector.load %arg5[%c128, %c0_41] : memref<256x192xbf16, #tpu.memory_space<vmem>>, vector<64x192xbf16>
    %c128_42 = arith.constant 128 : index
    %c0_43 = arith.constant 0 : index
    %75 = vector.load %arg6[%c128_42, %c0_43] : memref<256x1xf32, #tpu.memory_space<vmem>>, vector<64x1xf32>
    %c2 = arith.constant 2 : index
    %c0_44 = arith.constant 0 : index
    %c0_45 = arith.constant 0 : index
    %76 = vector.load %arg7[%c2, %c0_44, %c0_45] : memref<4x192x1xf32, #tpu.memory_space<vmem>>, vector<1x192x1xf32>
    %77 = vector.shape_cast %76 : vector<1x192x1xf32> to vector<192x1xf32>
    %c2_46 = arith.constant 2 : index
    %c0_47 = arith.constant 0 : index
    %c0_48 = arith.constant 0 : index
    %78 = vector.load %arg8[%c2_46, %c0_47, %c0_48] : memref<4x1x1xf32, #tpu.memory_space<vmem>>, vector<1x1x1xf32>
    %79 = vector.shape_cast %78 : vector<1x1x1xf32> to vector<1x1xf32>
    %c1_i32_49 = arith.constant 1 : i32
    %80 = tpu.dynamic_rotate %73 by %c1_i32_49 dim 1 : vector<64x128xf32>, i32 -> vector<64x128xf32>
    %c127_i32_50 = arith.constant 127 : i32
    %81 = tpu.dynamic_rotate %73 by %c127_i32_50 dim 1 : vector<64x128xf32>, i32 -> vector<64x128xf32>
    %82 = tpu.concatenate %80, %73, %81 in 0 : vector<64x128xf32>, vector<64x128xf32>, vector<64x128xf32> -> vector<192x128xf32>
    %83 = arith.truncf %82 : vector<192x128xf32> to vector<192x128xbf16>
    %cst_51 = arith.constant dense<0.000000e+00> : vector<64x128xf32>
    %84 = tpu.matmul %74, %83, %cst_51 {dimension_numbers = #tpu.dot_dimension_numbers<[1], [0], [0], [1], [0, 0, 1, 1], [], []>} : vector<64x192xbf16>, vector<192x128xbf16>, vector<64x128xf32> -> vector<64x128xf32>
    %85 = vector.broadcast %75 : vector<64x1xf32> to vector<64x128xf32>
    %86 = arith.addf %84, %85 : vector<64x128xf32>
    %87 = math.tanh %86 : vector<64x128xf32>
    %88 = arith.addf %87, %73 : vector<64x128xf32>
    %89 = vector.broadcast %0 : vector<1x128xf32> to vector<64x128xf32>
    %90 = arith.mulf %88, %89 : vector<64x128xf32>
    %c1_i32_52 = arith.constant 1 : i32
    %91 = tpu.dynamic_rotate %90 by %c1_i32_52 dim 1 : vector<64x128xf32>, i32 -> vector<64x128xf32>
    %c127_i32_53 = arith.constant 127 : i32
    %92 = tpu.dynamic_rotate %90 by %c127_i32_53 dim 1 : vector<64x128xf32>, i32 -> vector<64x128xf32>
    %93 = tpu.concatenate %91, %90, %92 in 0 : vector<64x128xf32>, vector<64x128xf32>, vector<64x128xf32> -> vector<192x128xf32>
    %94 = vector.broadcast %77 : vector<192x1xf32> to vector<192x128xf32>
    %95 = arith.mulf %94, %93 : vector<192x128xf32>
    %cst_54 = arith.constant dense<0.000000e+00> : vector<128xf32>
    %96 = vector.multi_reduction <add>, %95, %cst_54 [0] : vector<192x128xf32> to vector<128xf32>
    %97 = vector.shape_cast %96 : vector<128xf32> to vector<1x128xf32>
    %98 = vector.broadcast %79 : vector<1x1xf32> to vector<1x128xf32>
    %99 = arith.addf %97, %98 : vector<1x128xf32>
    %100 = math.tanh %99 : vector<1x128xf32>
    %c2_55 = arith.constant 2 : index
    %c0_56 = arith.constant 0 : index
    %101 = vector.load %arg9[%c2_55, %c0_56] : memref<4x128xf32, #tpu.memory_space<vmem>>, vector<1x128xf32>
    tpu.vector_store %arg9[%c2_55, %c0_56], %100 {strides = array<i32>} : memref<4x128xf32, #tpu.memory_space<vmem>>, vector<1x128xf32>,
    %102 = vector.extract_strided_slice %14 {offsets = [192, 0], sizes = [64, 128], strides = [1, 1]} : vector<256x128xf32> to vector<64x128xf32>
    %c192 = arith.constant 192 : index
    %c0_57 = arith.constant 0 : index
    %103 = vector.load %arg5[%c192, %c0_57] : memref<256x192xbf16, #tpu.memory_space<vmem>>, vector<64x192xbf16>
    %c192_58 = arith.constant 192 : index
    %c0_59 = arith.constant 0 : index
    %104 = vector.load %arg6[%c192_58, %c0_59] : memref<256x1xf32, #tpu.memory_space<vmem>>, vector<64x1xf32>
    %c3 = arith.constant 3 : index
    %c0_60 = arith.constant 0 : index
    %c0_61 = arith.constant 0 : index
    %105 = vector.load %arg7[%c3, %c0_60, %c0_61] : memref<4x192x1xf32, #tpu.memory_space<vmem>>, vector<1x192x1xf32>
    %106 = vector.shape_cast %105 : vector<1x192x1xf32> to vector<192x1xf32>
    %c3_62 = arith.constant 3 : index
    %c0_63 = arith.constant 0 : index
    %c0_64 = arith.constant 0 : index
    %107 = vector.load %arg8[%c3_62, %c0_63, %c0_64] : memref<4x1x1xf32, #tpu.memory_space<vmem>>, vector<1x1x1xf32>
    %108 = vector.shape_cast %107 : vector<1x1x1xf32> to vector<1x1xf32>
    %c1_i32_65 = arith.constant 1 : i32
    %109 = tpu.dynamic_rotate %102 by %c1_i32_65 dim 1 : vector<64x128xf32>, i32 -> vector<64x128xf32>
    %c127_i32_66 = arith.constant 127 : i32
    %110 = tpu.dynamic_rotate %102 by %c127_i32_66 dim 1 : vector<64x128xf32>, i32 -> vector<64x128xf32>
    %111 = tpu.concatenate %109, %102, %110 in 0 : vector<64x128xf32>, vector<64x128xf32>, vector<64x128xf32> -> vector<192x128xf32>
    %112 = arith.truncf %111 : vector<192x128xf32> to vector<192x128xbf16>
    %cst_67 = arith.constant dense<0.000000e+00> : vector<64x128xf32>
    %113 = tpu.matmul %103, %112, %cst_67 {dimension_numbers = #tpu.dot_dimension_numbers<[1], [0], [0], [1], [0, 0, 1, 1], [], []>} : vector<64x192xbf16>, vector<192x128xbf16>, vector<64x128xf32> -> vector<64x128xf32>
    %114 = vector.broadcast %104 : vector<64x1xf32> to vector<64x128xf32>
    %115 = arith.addf %113, %114 : vector<64x128xf32>
    %116 = math.tanh %115 : vector<64x128xf32>
    %117 = arith.addf %116, %102 : vector<64x128xf32>
    %118 = vector.broadcast %0 : vector<1x128xf32> to vector<64x128xf32>
    %119 = arith.mulf %117, %118 : vector<64x128xf32>
    %c1_i32_68 = arith.constant 1 : i32
    %120 = tpu.dynamic_rotate %119 by %c1_i32_68 dim 1 : vector<64x128xf32>, i32 -> vector<64x128xf32>
    %c127_i32_69 = arith.constant 127 : i32
    %121 = tpu.dynamic_rotate %119 by %c127_i32_69 dim 1 : vector<64x128xf32>, i32 -> vector<64x128xf32>
    %122 = tpu.concatenate %120, %119, %121 in 0 : vector<64x128xf32>, vector<64x128xf32>, vector<64x128xf32> -> vector<192x128xf32>
    %123 = vector.broadcast %106 : vector<192x1xf32> to vector<192x128xf32>
    %124 = arith.mulf %123, %122 : vector<192x128xf32>
    %cst_70 = arith.constant dense<0.000000e+00> : vector<128xf32>
    %125 = vector.multi_reduction <add>, %124, %cst_70 [0] : vector<192x128xf32> to vector<128xf32>
    %126 = vector.shape_cast %125 : vector<128xf32> to vector<1x128xf32>
    %127 = vector.broadcast %108 : vector<1x1xf32> to vector<1x128xf32>
    %128 = arith.addf %126, %127 : vector<1x128xf32>
    %129 = math.tanh %128 : vector<1x128xf32>
    %c3_71 = arith.constant 3 : index
    %c0_72 = arith.constant 0 : index
    %130 = vector.load %arg9[%c3_71, %c0_72] : memref<4x128xf32, #tpu.memory_space<vmem>>, vector<1x128xf32>
    tpu.vector_store %arg9[%c3_71, %c0_72], %129 {strides = array<i32>} : memref<4x128xf32, #tpu.memory_space<vmem>>, vector<1x128xf32>,
    return
  }
  func.func @transform_0(%arg0: i32) -> (i32, i32) {
    %c0_i32 = arith.constant 0 : i32
    %c0_i32_0 = arith.constant 0 : i32
    return %c0_i32, %arg0 : i32, i32
  }
  func.func @transform_1(%arg0: i32) -> (i32, i32) {
    %c0_i32 = arith.constant 0 : i32
    %c0_i32_0 = arith.constant 0 : i32
    return %c0_i32, %arg0 : i32, i32
  }
  func.func @transform_2(%arg0: i32) -> (i32, i32) {
    %c0_i32 = arith.constant 0 : i32
    %c0_i32_0 = arith.constant 0 : i32
    %c0_i32_1 = arith.constant 0 : i32
    return %c0_i32, %c0_i32_0 : i32, i32
  }
  func.func @transform_3(%arg0: i32) -> (i32, i32) {
    %c0_i32 = arith.constant 0 : i32
    %c0_i32_0 = arith.constant 0 : i32
    %c0_i32_1 = arith.constant 0 : i32
    return %c0_i32, %c0_i32_0 : i32, i32
  }
  func.func @transform_4(%arg0: i32) -> (i32, i32) {
    %c0_i32 = arith.constant 0 : i32
    %c0_i32_0 = arith.constant 0 : i32
    %c0_i32_1 = arith.constant 0 : i32
    return %c0_i32, %c0_i32_0 : i32, i32
  }
  func.func @transform_5(%arg0: i32) -> (i32, i32) {
    %c0_i32 = arith.constant 0 : i32
    %c0_i32_0 = arith.constant 0 : i32
    %c0_i32_1 = arith.constant 0 : i32
    return %c0_i32, %c0_i32_0 : i32, i32
  }
  func.func @transform_6(%arg0: i32) -> (i32, i32, i32) {
    %c0_i32 = arith.constant 0 : i32
    %c0_i32_0 = arith.constant 0 : i32
    %c0_i32_1 = arith.constant 0 : i32
    %c0_i32_2 = arith.constant 0 : i32
    return %c0_i32, %c0_i32_0, %c0_i32_1 : i32, i32, i32
  }
  func.func @transform_7(%arg0: i32) -> (i32, i32, i32) {
    %c0_i32 = arith.constant 0 : i32
    %c0_i32_0 = arith.constant 0 : i32
    %c0_i32_1 = arith.constant 0 : i32
    %c0_i32_2 = arith.constant 0 : i32
    return %c0_i32, %c0_i32_0, %c0_i32_1 : i32, i32, i32
  }
  func.func @transform_8(%arg0: i32) -> (i32, i32) {
    %c0_i32 = arith.constant 0 : i32
    %c0_i32_0 = arith.constant 0 : i32
    return %c0_i32, %arg0 : i32, i32
  }
}

</mosaic_0001>

<llo_original>
// kernel: tpu_custom_call.1
$region0: #{tpu_custom_call.1}
  #allocation0 [shape = 'u32[]', space=smem, size = 0x4, offset = 0x4, fixed_abs, tag = 'smem constant byte address 0x4 - core index']
  #allocation1 [shape = 'u32[144,128]{1,0:T(1,128)}', space=vmem, size = 0x12000, scoped, tag = 'internal scratch']
  %s0 = inlined_call_operand.vmem [shape: bf16[32,256], index: 0, kind: input, shape index: {}]
  %s1 = inlined_call_operand.vmem [shape: f32[1,256], index: 1, kind: input, shape index: {}]
  %s2 = inlined_call_operand.vmem [shape: bf16[256,96], index: 2, kind: input, shape index: {}]
  %s3 = inlined_call_operand.vmem [shape: f32[256,1], index: 3, kind: input, shape index: {}]
  %s4 = inlined_call_operand.vmem [shape: bf16[256,192], index: 4, kind: input, shape index: {}]
  %s5 = inlined_call_operand.vmem [shape: f32[256,1], index: 5, kind: input, shape index: {}]
  %s6 = inlined_call_operand.vmem [shape: f32[4,192,1], index: 6, kind: input, shape index: {}]
  %s7 = inlined_call_operand.vmem [shape: f32[4,1,1], index: 7, kind: input, shape index: {}]
  %s8 = inlined_call_operand.hbm [shape: f32[4,256], index: 8, kind: output, shape index: {}]
  %s9 = sld [smem:[#allocation0]]
  $region106: #{tpu_custom_call.1} parent=0
    _
  %s11 = ssub.s32 1, %s9
  %s12 = scalar_select 0, %s11, %s9
  $region1: #{tpu_custom_call.1} parent=0
    #allocation2 [shape = 'u8[16384]{0}', space=vmem, size = 0x4000, scoped, tag = 'input window, operand 0']
    #allocation3 [shape = 'u8[4096]{0}', space=vmem, size = 0x1000, scoped, tag = 'output window, operand 0']
    #allocation4 [shape = 's32[2]{0}', space=sflag, size = 0x8, scoped, tag = 'scoped memory for tpu_custom_call.1']
    %13 = vsyncpa [#allocation4], 0
    %s14 = scalar_lea.sflag [#allocation4], 1
    %15 = vsyncpa %s14, 0
    loop: start=0, step=1, limit=4
    $region2: #{tpu_custom_call.1} parent=1 // loop_pre_header
      _
    $region3: #{tpu_custom_call.1} parent=1 // loop_header
      %s17 = sphi 0, %s21
      %p18 = scmp.ge.s32.totalorder %s17, 4
      %s27 = sphi 0, %s29
      %s30 = sphi 0, %s27
      %s31 = sphi 0, %s30
      %s47 = sphi 0, %s31
      %s53 = sphi 0, %s55
      %s56 = sphi 0, %s53
      %s57 = sphi 0, %s56
      %s73 = sphi 0, %s57
      %s77 = sphi 0, %s77
      %s79 = sphi 0, %s77
      %s80 = sphi 0, %s79
      %s94 = sphi 0, %s80
      %s98 = sphi 0, %s98
      %s100 = sphi 0, %s98
      %s101 = sphi 0, %s100
      %s115 = sphi 0, %s101
      %s119 = sphi 0, %s119
      %s121 = sphi 0, %s119
      %s122 = sphi 0, %s121
      %s136 = sphi 0, %s122
      %s140 = sphi 0, %s140
      %s142 = sphi 0, %s140
      %s143 = sphi 0, %s142
      %s157 = sphi 0, %s143
      %s161 = sphi 0, %s161
      %s163 = sphi 0, %s161
      %s164 = sphi 0, %s163
      %s178 = sphi 0, %s164
      %s182 = sphi 0, %s182
      %s184 = sphi 0, %s182
      %s185 = sphi 0, %s184
      %s199 = sphi 0, %s185
      %s205 = sphi 0, %s207
      %s208 = sphi 0, %s205
      %s209 = sphi 0, %s208
      %s225 = sphi 0, %s209
    $region4: #{tpu_custom_call.1} parent=1 // loop_header_branch
      %20 = sbr.rel (%p18) target = $region8
    $region5: #{tpu_custom_call.1} parent=1 // loop_body
      %s22 = ssub.s32 %s17, 1
      %s23 = ssub.s32 %s17, 2
      %s24 = sadd.s32 %s17, 1
      %s25 = ssub.s32 %s17, %s24
      %p26 = scmp.eq.s32.totalorder %s25, 0
      %s28 = sadd.s32 %s27, 1
      %s29 = scalar_select %p26, %s27, %s28
      %p32 = pneg %p26
      %p33 = scmp.eq.s32.totalorder %s17, 1
      %p34 = por %p32, %p33
      %p35 = scmp.ne.s32.totalorder %s27, %s30
      %p36 = scmp.eq.s32.totalorder %s17, 0
      %p37 = por %p35, %p36
      %p38 = scmp.ne.s32.totalorder %s27, %s30
      %p39 = scmp.eq.s32.totalorder %s22, 1
      %p40 = por %p38, %p39
      %p41 = scmp.ne.s32.totalorder %s30, %s31
      %p42 = scmp.eq.s32.totalorder %s22, 0
      %p43 = por %p41, %p42
      %p44 = scmp.ne.s32.totalorder %s30, %s31
      %p45 = scmp.eq.s32.totalorder %s23, 1
      %p46 = por %p44, %p45
      %p48 = scmp.ne.s32.totalorder %s31, %s47
      %p49 = scmp.eq.s32.totalorder %s23, 0
      %p50 = por %p48, %p49
      %s51 = ssub.s32 %s17, %s24
      %p52 = scmp.eq.s32.totalorder %s51, 0
      %s54 = sadd.s32 %s53, 1
      %s55 = scalar_select %p52, %s53, %s54
      %p58 = pneg %p52
      %p59 = scmp.eq.s32.totalorder %s17, 1
      %p60 = por %p58, %p59
      %p61 = scmp.ne.s32.totalorder %s53, %s56
      %p62 = scmp.eq.s32.totalorder %s17, 0
      %p63 = por %p61, %p62
      %p64 = scmp.ne.s32.totalorder %s53, %s56
      %p65 = scmp.eq.s32.totalorder %s22, 1
      %p66 = por %p64, %p65
      %p67 = scmp.ne.s32.totalorder %s56, %s57
      %p68 = scmp.eq.s32.totalorder %s22, 0
      %p69 = por %p67, %p68
      %p70 = scmp.ne.s32.totalorder %s56, %s57
      %p71 = scmp.eq.s32.totalorder %s23, 1
      %p72 = por %p70, %p71
      %p74 = scmp.ne.s32.totalorder %s57, %s73
      %p75 = scmp.eq.s32.totalorder %s23, 0
      %p76 = por %p74, %p75
      %s78 = sadd.s32 %s77, 1
      %p81 = scmp.eq.s32.totalorder %s17, 1
      %p82 = scmp.ne.s32.totalorder %s77, %s79
      %p83 = scmp.eq.s32.totalorder %s17, 0
      %p84 = por %p82, %p83
      %p85 = scmp.ne.s32.totalorder %s77, %s79
      %p86 = scmp.eq.s32.totalorder %s22, 1
      %p87 = por %p85, %p86
      %p88 = scmp.ne.s32.totalorder %s79, %s80
      %p89 = scmp.eq.s32.totalorder %s22, 0
      %p90 = por %p88, %p89
      %p91 = scmp.ne.s32.totalorder %s79, %s80
      %p92 = scmp.eq.s32.totalorder %s23, 1
      %p93 = por %p91, %p92
      %p95 = scmp.ne.s32.totalorder %s80, %s94
      %p96 = scmp.eq.s32.totalorder %s23, 0
      %p97 = por %p95, %p96
      %s99 = sadd.s32 %s98, 1
      %p102 = scmp.eq.s32.totalorder %s17, 1
      %p103 = scmp.ne.s32.totalorder %s98, %s100
      %p104 = scmp.eq.s32.totalorder %s17, 0
      %p105 = por %p103, %p104
      %p106 = scmp.ne.s32.totalorder %s98, %s100
      %p107 = scmp.eq.s32.totalorder %s22, 1
      %p108 = por %p106, %p107
      %p109 = scmp.ne.s32.totalorder %s100, %s101
      %p110 = scmp.eq.s32.totalorder %s22, 0
      %p111 = por %p109, %p110
      %p112 = scmp.ne.s32.totalorder %s100, %s101
      %p113 = scmp.eq.s32.totalorder %s23, 1
      %p114 = por %p112, %p113
      %p116 = scmp.ne.s32.totalorder %s101, %s115
      %p117 = scmp.eq.s32.totalorder %s23, 0
      %p118 = por %p116, %p117
      %s120 = sadd.s32 %s119, 1
      %p123 = scmp.eq.s32.totalorder %s17, 1
      %p124 = scmp.ne.s32.totalorder %s119, %s121
      %p125 = scmp.eq.s32.totalorder %s17, 0
      %p126 = por %p124, %p125
      %p127 = scmp.ne.s32.totalorder %s119, %s121
      %p128 = scmp.eq.s32.totalorder %s22, 1
      %p129 = por %p127, %p128
      %p130 = scmp.ne.s32.totalorder %s121, %s122
      %p131 = scmp.eq.s32.totalorder %s22, 0
      %p132 = por %p130, %p131
      %p133 = scmp.ne.s32.totalorder %s121, %s122
      %p134 = scmp.eq.s32.totalorder %s23, 1
      %p135 = por %p133, %p134
      %p137 = scmp.ne.s32.totalorder %s122, %s136
      %p138 = scmp.eq.s32.totalorder %s23, 0
      %p139 = por %p137, %p138
      %s141 = sadd.s32 %s140, 1
      %p144 = scmp.eq.s32.totalorder %s17, 1
      %p145 = scmp.ne.s32.totalorder %s140, %s142
      %p146 = scmp.eq.s32.totalorder %s17, 0
      %p147 = por %p145, %p146
      %p148 = scmp.ne.s32.totalorder %s140, %s142
      %p149 = scmp.eq.s32.totalorder %s22, 1
      %p150 = por %p148, %p149
      %p151 = scmp.ne.s32.totalorder %s142, %s143
      %p152 = scmp.eq.s32.totalorder %s22, 0
      %p153 = por %p151, %p152
      %p154 = scmp.ne.s32.totalorder %s142, %s143
      %p155 = scmp.eq.s32.totalorder %s23, 1
      %p156 = por %p154, %p155
      %p158 = scmp.ne.s32.totalorder %s143, %s157
      %p159 = scmp.eq.s32.totalorder %s23, 0
      %p160 = por %p158, %p159
      %s162 = sadd.s32 %s161, 1
      %p165 = scmp.eq.s32.totalorder %s17, 1
      %p166 = scmp.ne.s32.totalorder %s161, %s163
      %p167 = scmp.eq.s32.totalorder %s17, 0
      %p168 = por %p166, %p167
      %p169 = scmp.ne.s32.totalorder %s161, %s163
      %p170 = scmp.eq.s32.totalorder %s22, 1
      %p171 = por %p169, %p170
      %p172 = scmp.ne.s32.totalorder %s163, %s164
      %p173 = scmp.eq.s32.totalorder %s22, 0
      %p174 = por %p172, %p173
      %p175 = scmp.ne.s32.totalorder %s163, %s164
      %p176 = scmp.eq.s32.totalorder %s23, 1
      %p177 = por %p175, %p176
      %p179 = scmp.ne.s32.totalorder %s164, %s178
      %p180 = scmp.eq.s32.totalorder %s23, 0
      %p181 = por %p179, %p180
      %s183 = sadd.s32 %s182, 1
      %p186 = scmp.eq.s32.totalorder %s17, 1
      %p187 = scmp.ne.s32.totalorder %s182, %s184
      %p188 = scmp.eq.s32.totalorder %s17, 0
      %p189 = por %p187, %p188
      %p190 = scmp.ne.s32.totalorder %s182, %s184
      %p191 = scmp.eq.s32.totalorder %s22, 1
      %p192 = por %p190, %p191
      %p193 = scmp.ne.s32.totalorder %s184, %s185
      %p194 = scmp.eq.s32.totalorder %s22, 0
      %p195 = por %p193, %p194
      %p196 = scmp.ne.s32.totalorder %s184, %s185
      %p197 = scmp.eq.s32.totalorder %s23, 1
      %p198 = por %p196, %p197
      %p200 = scmp.ne.s32.totalorder %s185, %s199
      %p201 = scmp.eq.s32.totalorder %s23, 0
      %p202 = por %p200, %p201
      %s203 = ssub.s32 %s17, %s24
      %p204 = scmp.eq.s32.totalorder %s203, 0
      %s206 = sadd.s32 %s205, 1
      %s207 = scalar_select %p204, %s205, %s206
      %p210 = pneg %p204
      %p211 = scmp.eq.s32.totalorder %s17, 1
      %p212 = por %p210, %p211
      %p213 = scmp.ne.s32.totalorder %s205, %s208
      %p214 = scmp.eq.s32.totalorder %s17, 0
      %p215 = por %p213, %p214
      %p216 = scmp.ne.s32.totalorder %s205, %s208
      %p217 = scmp.eq.s32.totalorder %s22, 1
      %p218 = por %p216, %p217
      %p219 = scmp.ne.s32.totalorder %s208, %s209
      %p220 = scmp.eq.s32.totalorder %s22, 0
      %p221 = por %p219, %p220
      %p222 = scmp.ne.s32.totalorder %s208, %s209
      %p223 = scmp.eq.s32.totalorder %s23, 1
      %p224 = por %p222, %p223
      %p226 = scmp.ne.s32.totalorder %s209, %s225
      %p227 = scmp.eq.s32.totalorder %s23, 0
      %p228 = por %p226, %p227
      %p229 = scmp.le.s32.totalorder 1, %s17
      %p230 = scmp.lt.s32.totalorder %s17, 3
      %p231 = pnand %p229, %p230
      %p232 = pneg %p231
      // Predicated region
      $region9: #{tpu_custom_call.1} parent=5 // pred_check
        _
      $region10: #{tpu_custom_call.1} parent=5 // pred_check_branch
        %234 = sbr.rel (%p231) target = $region12
      $region11: #{tpu_custom_call.1} parent=5 // pred_region
        %s235 = ssub.s32 %s17, 1
        // Predicated region
        $region13: #{tpu_custom_call.1} parent=11 // pred_check
          %p236 = pneg %p90
        $region14: #{tpu_custom_call.1} parent=11 // pred_check_branch
          %238 = sbr.rel (%p236) target = $region16
        $region15: #{tpu_custom_call.1} parent=11 // pred_region
          _
        $region16: #{tpu_custom_call.1} parent=11 // pred_fallthru
          _
        // Predicated region
        $region17: #{tpu_custom_call.1} parent=11 // pred_check
          %p239 = pneg %p111
        $region18: #{tpu_custom_call.1} parent=11 // pred_check_branch
          %241 = sbr.rel (%p239) target = $region20
        $region19: #{tpu_custom_call.1} parent=11 // pred_region
          _
        $region20: #{tpu_custom_call.1} parent=11 // pred_fallthru
          _
        // Predicated region
        $region21: #{tpu_custom_call.1} parent=11 // pred_check
          %p242 = pneg %p132
        $region22: #{tpu_custom_call.1} parent=11 // pred_check_branch
          %244 = sbr.rel (%p242) target = $region24
        $region23: #{tpu_custom_call.1} parent=11 // pred_region
          _
        $region24: #{tpu_custom_call.1} parent=11 // pred_fallthru
          _
        // Predicated region
        $region25: #{tpu_custom_call.1} parent=11 // pred_check
          %p245 = pneg %p153
        $region26: #{tpu_custom_call.1} parent=11 // pred_check_branch
          %247 = sbr.rel (%p245) target = $region28
        $region27: #{tpu_custom_call.1} parent=11 // pred_region
          _
        $region28: #{tpu_custom_call.1} parent=11 // pred_fallthru
          _
        // Predicated region
        $region29: #{tpu_custom_call.1} parent=11 // pred_check
          %p248 = pneg %p174
        $region30: #{tpu_custom_call.1} parent=11 // pred_check_branch
          %250 = sbr.rel (%p248) target = $region32
        $region31: #{tpu_custom_call.1} parent=11 // pred_region
          _
        $region32: #{tpu_custom_call.1} parent=11 // pred_fallthru
          _
        // Predicated region
        $region33: #{tpu_custom_call.1} parent=11 // pred_check
          %p251 = pneg %p195
        $region34: #{tpu_custom_call.1} parent=11 // pred_check_branch
          %253 = sbr.rel (%p251) target = $region36
        $region35: #{tpu_custom_call.1} parent=11 // pred_region
          _
        $region36: #{tpu_custom_call.1} parent=11 // pred_fallthru
          _
      $region12: #{tpu_custom_call.1} parent=5 // pred_fallthru
        _
      %p254 = scmp.lt.s32.totalorder %s17, 2
      // Predicated region
      $region37: #{tpu_custom_call.1} parent=5 // pred_check
        %p255 = pneg %p254
      $region38: #{tpu_custom_call.1} parent=5 // pred_check_branch
        %257 = sbr.rel (%p255) target = $region40
      $region39: #{tpu_custom_call.1} parent=5 // pred_region
        // Predicated region
        $region41: #{tpu_custom_call.1} parent=39 // pred_check
          %p258 = pneg %p37
        $region42: #{tpu_custom_call.1} parent=39 // pred_check_branch
          %260 = sbr.rel (%p258) target = $region44
        $region43: #{tpu_custom_call.1} parent=39 // pred_region
          %s261 = sand.u32 %s27, 1
          %s262 = sand.u32 %s27, 1
          %s263 = smul.addr %s262, 16
          %s264 = scalar_lea.vmem [#allocation2], %s263
          %s265 = smul.addr %s17, 4
          %s266 = scalar_lea.vmem %s0, %s265
          // Predicated region
          $region45: #{tpu_custom_call.1} parent=43 // pred_check
            _
          $region46: #{tpu_custom_call.1} parent=43 // pred_check_branch
            %268 = sbr.rel (0) target = $region48
          $region47: #{tpu_custom_call.1} parent=43 // pred_region
            // Predicated region
            $region49: #{tpu_custom_call.1} parent=47 // pred_check
              _
            $region50: #{tpu_custom_call.1} parent=47 // pred_check_branch
              %270 = sbr.rel target = $region52
            $region51: #{tpu_custom_call.1} parent=47 // pred_region
              // Predicated region
              $region64: #{tpu_custom_call.1} parent=51 // pred_check
                _
              $region65: #{tpu_custom_call.1} parent=51 // pred_check_branch
                %292 = sbr.rel (0) target = $region67
              $region66: #{tpu_custom_call.1} parent=51 // pred_region
                loop: start=0, step=1, limit=1
                $region68: #{tpu_custom_call.1} parent=66 // loop_pre_header
                  _
                $region69: #{tpu_custom_call.1} parent=66 // loop_header
                  %s294 = sphi 0, %s298
                  %p295 = scmp.ge.s32.totalorder %s294, 1
                  %s299 = sphi %s266, %s266
                  %s300 = sphi %s264, %s264
                $region70: #{tpu_custom_call.1} parent=66 // loop_header_branch
                  %297 = sbr.rel (%p295) target = $region74
                $region71: #{tpu_custom_call.1} parent=66 // loop_body
                  _
                $region72: #{tpu_custom_call.1} parent=66 // loop_footer
                  %s298 = sadd.s32 1, %s294
                $region73: #{tpu_custom_call.1} parent=66 // loop_footer_branch
                  %293 = sbr.rel target = $region69
                $region74: #{tpu_custom_call.1} parent=66 // loop_exit
                  _
                %s302 = ssub.s32 16, 1
                loop: start=0, step=1, limit=1
                $region75: #{tpu_custom_call.1} parent=66 // loop_pre_header
                  _
                $region76: #{tpu_custom_call.1} parent=66 // loop_header
                  %s304 = sphi 0, %s308
                  %p305 = scmp.ge.s32.totalorder %s304, 1
                  %s309 = sphi %s266, %s266
                  %s310 = sphi %s264, %s264
                $region77: #{tpu_custom_call.1} parent=66 // loop_header_branch
                  %307 = sbr.rel (%p305) target = $region81
                $region78: #{tpu_custom_call.1} parent=66 // loop_body
                  %v311 = vld [vmem:[%s309] sm:%s302]
                  %312 = vst [vmem:[%s310] sm:%s302] %v311
                  %v313 = vld [vmem:[%s309 + $0x8] sm:%s302]
                  %314 = vst [vmem:[%s310 + $0x4] sm:%s302] %v313
                  %v315 = vld [vmem:[%s309 + $0x10] sm:%s302]
                  %316 = vst [vmem:[%s310 + $0x8] sm:%s302] %v315
                  %v317 = vld [vmem:[%s309 + $0x18] sm:%s302]
                  %318 = vst [vmem:[%s310 + $0xc] sm:%s302] %v317
                $region79: #{tpu_custom_call.1} parent=66 // loop_footer
                  %s308 = sadd.s32 1, %s304
                $region80: #{tpu_custom_call.1} parent=66 // loop_footer_branch
                  %303 = sbr.rel target = $region76
                $region81: #{tpu_custom_call.1} parent=66 // loop_exit
                  _
              $region67: #{tpu_custom_call.1} parent=51 // pred_fallthru
                _
            $region52: #{tpu_custom_call.1} parent=47 // pred_fallthru
              _
            // Predicated region
            $region53: #{tpu_custom_call.1} parent=47 // pred_check
              _
            $region54: #{tpu_custom_call.1} parent=47 // pred_check_branch
              %272 = sbr.rel (0) target = $region56
            $region55: #{tpu_custom_call.1} parent=47 // pred_region
              %s274 = ssub.s32 16, 1
              loop: start=0, step=1, limit=1
              $region57: #{tpu_custom_call.1} parent=55 // loop_pre_header
                _
              $region58: #{tpu_custom_call.1} parent=55 // loop_header
                %s276 = sphi 0, %s280
                %p277 = scmp.ge.s32.totalorder %s276, 1
                %s281 = sphi %s266, %s266
                %s282 = sphi %s264, %s264
              $region59: #{tpu_custom_call.1} parent=55 // loop_header_branch
                %279 = sbr.rel (%p277) target = $region63
              $region60: #{tpu_custom_call.1} parent=55 // loop_body
                %v283 = vld [vmem:[%s281] sm:%s274]
                %284 = vst [vmem:[%s282] sm:%s274] %v283
                %v285 = vld [vmem:[%s281 + $0x8] sm:%s274]
                %286 = vst [vmem:[%s282 + $0x4] sm:%s274] %v285
                %v287 = vld [vmem:[%s281 + $0x10] sm:%s274]
                %288 = vst [vmem:[%s282 + $0x8] sm:%s274] %v287
                %v289 = vld [vmem:[%s281 + $0x18] sm:%s274]
                %290 = vst [vmem:[%s282 + $0xc] sm:%s274] %v289
              $region61: #{tpu_custom_call.1} parent=55 // loop_footer
                %s280 = sadd.s32 1, %s276
              $region62: #{tpu_custom_call.1} parent=55 // loop_footer_branch
                %275 = sbr.rel target = $region58
              $region63: #{tpu_custom_call.1} parent=55 // loop_exit
                _
            $region56: #{tpu_custom_call.1} parent=47 // pred_fallthru
              _
          $region48: #{tpu_custom_call.1} parent=43 // pred_fallthru
            _
          %319 = vnop
        $region44: #{tpu_custom_call.1} parent=39 // pred_fallthru
          _
        // Predicated region
        $region82: #{tpu_custom_call.1} parent=39 // pred_check
          %p320 = pneg %p63
        $region83: #{tpu_custom_call.1} parent=39 // pred_check_branch
          %322 = sbr.rel (%p320) target = $region85
        $region84: #{tpu_custom_call.1} parent=39 // pred_region
          %p323 = scmp.lt.s32.totalorder %s17, 1
          %s324 = scalar_select %p323, %s17, 1
          %s325 = scalar_lea.vmem %s1, %s324
        $region85: #{tpu_custom_call.1} parent=39 // pred_fallthru
          _
      $region40: #{tpu_custom_call.1} parent=5 // pred_fallthru
        _
      %p326 = scmp.le.s32.totalorder 1, %s17
      %p327 = scmp.lt.s32.totalorder %s17, 3
      %p328 = pnand %p326, %p327
      %p329 = pneg %p328
      // Predicated region
      $region86: #{tpu_custom_call.1} parent=5 // pred_check
        _
      $region87: #{tpu_custom_call.1} parent=5 // pred_check_branch
        %331 = sbr.rel (%p328) target = $region89
      $region88: #{tpu_custom_call.1} parent=5 // pred_region
        %s332 = ssub.s32 %s17, 1
        %s333 = sand.u32 %s30, 1
        %s334 = sand.u32 %s30, 1
        %s335 = smul.addr %s334, 16
        %s336 = scalar_lea.vmem [#allocation2], %s335
        // Predicated region
        $region90: #{tpu_custom_call.1} parent=88 // pred_check
          %p337 = pneg %p43
        $region91: #{tpu_custom_call.1} parent=88 // pred_check_branch
          %339 = sbr.rel (%p337) target = $region93
        $region92: #{tpu_custom_call.1} parent=88 // pred_region
          _
        $region93: #{tpu_custom_call.1} parent=88 // pred_fallthru
          _
        %s340 = sand.u32 %s30, 1
        %s341 = sand.u32 %s30, 1
        %s342 = smul.addr %s341, 16
        %s343 = scalar_lea.vmem [#allocation2], %s342
        %p344 = pneg %p43
        %p345 = pneg %p40
        %p346 = scmp.lt.s32.totalorder %s22, 1
        %s347 = scalar_select %p346, %s22, 1
        %s348 = scalar_lea.vmem %s1, %s347
        %p349 = pneg %p69
        %p350 = pneg %p66
        %p351 = pneg %p90
        %p352 = pneg %p87
        %p353 = pneg %p111
        %p354 = pneg %p108
        %p355 = pneg %p132
        %p356 = pneg %p129
        %p357 = pneg %p153
        %p358 = pneg %p150
        %p359 = pneg %p174
        %p360 = pneg %p171
        %p361 = pneg %p195
        %p362 = pneg %p192
        %p363 = pneg %p221
        %p364 = pneg %p218
        %s365 = sand.u32 %s208, 1
        %s366 = scalar_lea.sflag [#allocation4], %s365
        %s367 = sand.u32 %s208, 1
        %s368 = smul.addr %s367, 4
        %s369 = scalar_lea.vmem [#allocation3], %s368
        %p370 = scmp.lt.s32.totalorder %s22, 1
        %s371 = scalar_select %p370, %s22, 1
        %s372 = scalar_lea.vmem %s1, %s371
        %v374 = vld [vmem:[%s372] sm:$0x1]
        %v375 = vld [vmem:[%s336] sm:$0xf]
        %v376 = vld [vmem:[%s336 + $0x4] sm:$0xf]
        %v377 = vld [vmem:[%s336 + $0x8] sm:$0xf]
        %v378 = vld [vmem:[%s336 + $0xc] sm:$0xf]
        %v379 = vunpack.c.l.bf16 %v375
        %v380 = vunpack.c.l.bf16 %v376
        %v381 = vunpack.c.l.bf16 %v377
        %v382 = vunpack.c.l.bf16 %v378
        %383 = vrot.lane.b32.xlu0 %v379, 1
        %v384 = vpop.permute.xlu0 %383
        %385 = vrot.lane.b32.xlu0 %v380, 1
        %v386 = vpop.permute.xlu0 %385
        %387 = vrot.lane.b32.xlu0 %v381, 1
        %v388 = vpop.permute.xlu0 %387
        %389 = vrot.lane.b32.xlu0 %v382, 1
        %v390 = vpop.permute.xlu0 %389
        %391 = vrot.lane.b32.xlu0 %v379, 127
        %v392 = vpop.permute.xlu0 %391
        %393 = vrot.lane.b32.xlu0 %v380, 127
        %v394 = vpop.permute.xlu0 %393
        %395 = vrot.lane.b32.xlu0 %v381, 127
        %v396 = vpop.permute.xlu0 %395
        %397 = vrot.lane.b32.xlu0 %v382, 127
        %v398 = vpop.permute.xlu0 %397
        %v399 = vpack.c.bf16 %v386, %v384
        %v400 = vpack.c.bf16 %v390, %v388
        %v401 = vpack.c.bf16 %v380, %v379
        %v402 = vpack.c.bf16 %v382, %v381
        %v403 = vpack.c.bf16 %v394, %v392
        %v404 = vpack.c.bf16 %v398, %v396
        %v405 = vld [vmem:[%s2] sm:$0xf]
        %v406 = vld [vmem:[%s2 + $0x4] sm:$0xf]
        %v407 = vld [vmem:[%s2 + $0x8] sm:$0xf]
        %v408 = vld [vmem:[%s2 + $0xc] sm:$0xf]
        %v409 = vld [vmem:[%s2 + $0x10] sm:$0xf]
        %v410 = vld [vmem:[%s2 + $0x14] sm:$0xf]
        %v411 = vld [vmem:[%s2 + $0x18] sm:$0xf]
        %v412 = vld [vmem:[%s2 + $0x1c] sm:$0xf]
        %v413 = vld [vmem:[%s2 + $0x20] sm:$0xf]
        %v414 = vld [vmem:[%s2 + $0x24] sm:$0xf]
        %v415 = vld [vmem:[%s2 + $0x28] sm:$0xf]
        %v416 = vld [vmem:[%s2 + $0x2c] sm:$0xf]
        %v417 = vld [vmem:[%s2 + $0x30] sm:$0xf]
        %v418 = vld [vmem:[%s2 + $0x34] sm:$0xf]
        %v419 = vld [vmem:[%s2 + $0x38] sm:$0xf]
        %v420 = vld [vmem:[%s2 + $0x3c] sm:$0xf]
        %v421 = vld [vmem:[%s2 + $0x40] sm:$0xf]
        %v422 = vld [vmem:[%s2 + $0x44] sm:$0xf]
        %v423 = vld [vmem:[%s2 + $0x48] sm:$0xf]
        %v424 = vld [vmem:[%s2 + $0x4c] sm:$0xf]
        %v425 = vld [vmem:[%s2 + $0x50] sm:$0xf]
        %v426 = vld [vmem:[%s2 + $0x54] sm:$0xf]
        %v427 = vld [vmem:[%s2 + $0x58] sm:$0xf]
        %v428 = vld [vmem:[%s2 + $0x5c] sm:$0xf]
        %v429 = vld [vmem:[%s2 + $0x60] sm:$0xf]
        %v430 = vld [vmem:[%s2 + $0x64] sm:$0xf]
        %v431 = vld [vmem:[%s2 + $0x68] sm:$0xf]
        %v432 = vld [vmem:[%s2 + $0x6c] sm:$0xf]
        %v433 = vld [vmem:[%s2 + $0x70] sm:$0xf]
        %v434 = vld [vmem:[%s2 + $0x74] sm:$0xf]
        %v435 = vld [vmem:[%s2 + $0x78] sm:$0xf]
        %v436 = vld [vmem:[%s2 + $0x7c] sm:$0xf]
        %v437 = vld [vmem:[%s3] sm:$0xff]
        %v438 = vld [vmem:[%s3 + $0x8] sm:$0xff]
        %v439 = vld [vmem:[%s3 + $0x10] sm:$0xff]
        %v440 = vld [vmem:[%s3 + $0x18] sm:$0xff]
        %v441 = vld [vmem:[%s3 + $0x20] sm:$0xff]
        %v442 = vld [vmem:[%s3 + $0x28] sm:$0xff]
        %v443 = vld [vmem:[%s3 + $0x30] sm:$0xff]
        %v444 = vld [vmem:[%s3 + $0x38] sm:$0xff]
        %v445 = vld [vmem:[%s3 + $0x40] sm:$0xff]
        %v446 = vld [vmem:[%s3 + $0x48] sm:$0xff]
        %v447 = vld [vmem:[%s3 + $0x50] sm:$0xff]
        %v448 = vld [vmem:[%s3 + $0x58] sm:$0xff]
        %v449 = vld [vmem:[%s3 + $0x60] sm:$0xff]
        %v450 = vld [vmem:[%s3 + $0x68] sm:$0xff]
        %v451 = vld [vmem:[%s3 + $0x70] sm:$0xff]
        %v452 = vld [vmem:[%s3 + $0x78] sm:$0xff]
        %v453 = vld [vmem:[%s3 + $0x80] sm:$0xff]
        %v454 = vld [vmem:[%s3 + $0x88] sm:$0xff]
        %v455 = vld [vmem:[%s3 + $0x90] sm:$0xff]
        %v456 = vld [vmem:[%s3 + $0x98] sm:$0xff]
        %v457 = vld [vmem:[%s3 + $0xa0] sm:$0xff]
        %v458 = vld [vmem:[%s3 + $0xa8] sm:$0xff]
        %v459 = vld [vmem:[%s3 + $0xb0] sm:$0xff]
        %v460 = vld [vmem:[%s3 + $0xb8] sm:$0xff]
        %v461 = vld [vmem:[%s3 + $0xc0] sm:$0xff]
        %v462 = vld [vmem:[%s3 + $0xc8] sm:$0xff]
        %v463 = vld [vmem:[%s3 + $0xd0] sm:$0xff]
        %v464 = vld [vmem:[%s3 + $0xd8] sm:$0xff]
        %v465 = vld [vmem:[%s3 + $0xe0] sm:$0xff]
        %v466 = vld [vmem:[%s3 + $0xe8] sm:$0xff]
        %v467 = vld [vmem:[%s3 + $0xf0] sm:$0xff]
        %v468 = vld [vmem:[%s3 + $0xf8] sm:$0xff]
        %470 = vset.pattern.permute.xlu0 0
        %471 = vperm.xlu0 %470, %v437
        %v472 = vpop.permute.xlu0 %471
        %475 = vset.pattern.permute.xlu0 0
        %476 = vperm.xlu0 %475, %v438
        %v477 = vpop.permute.xlu0 %476
        %480 = vset.pattern.permute.xlu0 0
        %481 = vperm.xlu0 %480, %v439
        %v482 = vpop.permute.xlu0 %481
        %485 = vset.pattern.permute.xlu0 0
        %486 = vperm.xlu0 %485, %v440
        %v487 = vpop.permute.xlu0 %486
        %490 = vset.pattern.permute.xlu0 0
        %491 = vperm.xlu0 %490, %v441
        %v492 = vpop.permute.xlu0 %491
        %495 = vset.pattern.permute.xlu0 0
        %496 = vperm.xlu0 %495, %v442
        %v497 = vpop.permute.xlu0 %496
        %500 = vset.pattern.permute.xlu0 0
        %501 = vperm.xlu0 %500, %v443
        %v502 = vpop.permute.xlu0 %501
        %505 = vset.pattern.permute.xlu0 0
        %506 = vperm.xlu0 %505, %v444
        %v507 = vpop.permute.xlu0 %506
        %510 = vset.pattern.permute.xlu0 0
        %511 = vperm.xlu0 %510, %v445
        %v512 = vpop.permute.xlu0 %511
        %515 = vset.pattern.permute.xlu0 0
        %516 = vperm.xlu0 %515, %v446
        %v517 = vpop.permute.xlu0 %516
        %520 = vset.pattern.permute.xlu0 0
        %521 = vperm.xlu0 %520, %v447
        %v522 = vpop.permute.xlu0 %521
        %525 = vset.pattern.permute.xlu0 0
        %526 = vperm.xlu0 %525, %v448
        %v527 = vpop.permute.xlu0 %526
        %530 = vset.pattern.permute.xlu0 0
        %531 = vperm.xlu0 %530, %v449
        %v532 = vpop.permute.xlu0 %531
        %535 = vset.pattern.permute.xlu0 0
        %536 = vperm.xlu0 %535, %v450
        %v537 = vpop.permute.xlu0 %536
        %540 = vset.pattern.permute.xlu0 0
        %541 = vperm.xlu0 %540, %v451
        %v542 = vpop.permute.xlu0 %541
        %545 = vset.pattern.permute.xlu0 0
        %546 = vperm.xlu0 %545, %v452
        %v547 = vpop.permute.xlu0 %546
        %550 = vset.pattern.permute.xlu0 0
        %551 = vperm.xlu0 %550, %v453
        %v552 = vpop.permute.xlu0 %551
        %555 = vset.pattern.permute.xlu0 0
        %556 = vperm.xlu0 %555, %v454
        %v557 = vpop.permute.xlu0 %556
        %560 = vset.pattern.permute.xlu0 0
        %561 = vperm.xlu0 %560, %v455
        %v562 = vpop.permute.xlu0 %561
        %565 = vset.pattern.permute.xlu0 0
        %566 = vperm.xlu0 %565, %v456
        %v567 = vpop.permute.xlu0 %566
        %570 = vset.pattern.permute.xlu0 0
        %571 = vperm.xlu0 %570, %v457
        %v572 = vpop.permute.xlu0 %571
        %575 = vset.pattern.permute.xlu0 0
        %576 = vperm.xlu0 %575, %v458
        %v577 = vpop.permute.xlu0 %576
        %580 = vset.pattern.permute.xlu0 0
        %581 = vperm.xlu0 %580, %v459
        %v582 = vpop.permute.xlu0 %581
        %585 = vset.pattern.permute.xlu0 0
        %586 = vperm.xlu0 %585, %v460
        %v587 = vpop.permute.xlu0 %586
        %590 = vset.pattern.permute.xlu0 0
        %591 = vperm.xlu0 %590, %v461
        %v592 = vpop.permute.xlu0 %591
        %595 = vset.pattern.permute.xlu0 0
        %596 = vperm.xlu0 %595, %v462
        %v597 = vpop.permute.xlu0 %596
        %600 = vset.pattern.permute.xlu0 0
        %601 = vperm.xlu0 %600, %v463
        %v602 = vpop.permute.xlu0 %601
        %605 = vset.pattern.permute.xlu0 0
        %606 = vperm.xlu0 %605, %v464
        %v607 = vpop.permute.xlu0 %606
        %610 = vset.pattern.permute.xlu0 0
        %611 = vperm.xlu0 %610, %v465
        %v612 = vpop.permute.xlu0 %611
        %615 = vset.pattern.permute.xlu0 0
        %616 = vperm.xlu0 %615, %v466
        %v617 = vpop.permute.xlu0 %616
        %620 = vset.pattern.permute.xlu0 0
        %621 = vperm.xlu0 %620, %v467
        %v622 = vpop.permute.xlu0 %621
        %625 = vset.pattern.permute.xlu0 0
        %626 = vperm.xlu0 %625, %v468
        %v627 = vpop.permute.xlu0 %626
        %v661 = vunpack.c.l.b16 %v405
        %v662 = vunpack.c.l.b16 %v406
        %v663 = vunpack.c.l.b16 %v407
        %v664 = vunpack.c.l.b16 %v408
        %v665 = vunpack.c.l.b16 %v409
        %v666 = vunpack.c.l.b16 %v410
        %v667 = vunpack.c.l.b16 %v411
        %v668 = vunpack.c.l.b16 %v412
        %v669 = vunpack.c.l.b16 %v413
        %v670 = vunpack.c.l.b16 %v414
        %v671 = vunpack.c.l.b16 %v415
        %v672 = vunpack.c.l.b16 %v416
        %v673 = vunpack.c.l.b16 %v417
        %v674 = vunpack.c.l.b16 %v418
        %v675 = vunpack.c.l.b16 %v419
        %v676 = vunpack.c.l.b16 %v420
        %v677 = vunpack.c.l.b16 %v421
        %v678 = vunpack.c.l.b16 %v422
        %v679 = vunpack.c.l.b16 %v423
        %v680 = vunpack.c.l.b16 %v424
        %v681 = vunpack.c.l.b16 %v425
        %v682 = vunpack.c.l.b16 %v426
        %v683 = vunpack.c.l.b16 %v427
        %v684 = vunpack.c.l.b16 %v428
        %v685 = vunpack.c.l.b16 %v429
        %v686 = vunpack.c.l.b16 %v430
        %v687 = vunpack.c.l.b16 %v431
        %v688 = vunpack.c.l.b16 %v432
        %v689 = vunpack.c.l.b16 %v433
        %v690 = vunpack.c.l.b16 %v434
        %v691 = vunpack.c.l.b16 %v435
        %v692 = vunpack.c.l.b16 %v436
        %v693 = vpack.c.b16 %v662, %v661
        %v694 = vpack.c.b16 %v664, %v663
        %v695 = vpack.c.b16 %v666, %v665
        %v696 = vpack.c.b16 %v668, %v667
        %v697 = vpack.c.b16 %v670, %v669
        %v698 = vpack.c.b16 %v672, %v671
        %v699 = vpack.c.b16 %v674, %v673
        %v700 = vpack.c.b16 %v676, %v675
        %v701 = vpack.c.b16 %v678, %v677
        %v702 = vpack.c.b16 %v680, %v679
        %v703 = vpack.c.b16 %v682, %v681
        %v704 = vpack.c.b16 %v684, %v683
        %v705 = vpack.c.b16 %v686, %v685
        %v706 = vpack.c.b16 %v688, %v687
        %v707 = vpack.c.b16 %v690, %v689
        %v708 = vpack.c.b16 %v692, %v691
        %vm709 = vcmask 785408
        %v711 = vsel %vm709, %v693, 0
        %v714 = vsel %vm709, %v694, 0
        %v717 = vsel %vm709, %v695, 0
        %v720 = vsel %vm709, %v696, 0
        %v723 = vsel %vm709, %v697, 0
        %v726 = vsel %vm709, %v698, 0
        %v729 = vsel %vm709, %v699, 0
        %v732 = vsel %vm709, %v700, 0
        %v735 = vsel %vm709, %v701, 0
        %v738 = vsel %vm709, %v702, 0
        %v741 = vsel %vm709, %v703, 0
        %v744 = vsel %vm709, %v704, 0
        %v747 = vsel %vm709, %v705, 0
        %v750 = vsel %vm709, %v706, 0
        %v753 = vsel %vm709, %v707, 0
        %v756 = vsel %vm709, %v708, 0
        %758 = vmatprep.subr.bf16.mxu0 0
        %759 = vmatpush1.bf16.msra.mxu0 0
        %760 = vmatprep.subr.bf16.mxu0 0
        %761 = vmatpush1.bf16.msra.mxu0 0
        %762 = vmatprep.subr.bf16.mxu0 0
        %763 = vmatpush1.bf16.msra.mxu0 %v404
        %764 = vmatprep.subr.bf16.mxu0 0
        %765 = vmatpush1.bf16.msra.mxu0 %v403
        %766 = vmatprep.subr.bf16.mxu0 0
        %767 = vmatpush1.bf16.msra.mxu0 %v402
        %768 = vmatprep.subr.bf16.mxu0 0
        %769 = vmatpush1.bf16.msra.mxu0 %v401
        %770 = vmatprep.subr.bf16.mxu0 0
        %771 = vmatpush1.bf16.msra.mxu0 %v400
        %772 = vmatprep.subr.bf16.mxu0 0
        %773 = vmatpush1.bf16.msra.mxu0 %v399
        %774 = vmatprep.subr.bf16.mxu0 0
        %775 = vmatpush2.bf16.msra.mxu0 0
        %776 = vmatprep.subr.bf16.mxu0 0
        %777 = vmatpush2.bf16.msra.mxu0 0
        %778 = vmatprep.subr.bf16.mxu0 0
        %779 = vmatpush2.bf16.msra.mxu0 0
        %780 = vmatprep.subr.bf16.mxu0 0
        %781 = vmatpush2.bf16.msra.mxu0 0
        %782 = vmatprep.subr.bf16.mxu0 0
        %783 = vmatpush2.bf16.msra.mxu0 0
        %784 = vmatprep.subr.bf16.mxu0 0
        %785 = vmatpush2.bf16.msra.mxu0 0
        %786 = vmatprep.subr.bf16.mxu0 0
        %787 = vmatpush2.bf16.msra.mxu0 0
        %788 = vmatprep.subr.bf16.mxu0 0
        %789 = vmatpush2.bf16.msra.mxu0 0
        %790 = vmatprep.mubr.bf16.mxu0 0
        %791 = vmatmul.mubr.bf16.gmra.mxu0 %v711
        %v792 = vpop.f32.mrf.mxu0
        %v793 = vadd.f32 %v472, %v792
        %v794 = vpop.f32.mrf.mxu0
        %v795 = vpop.f32.mrf.mxu0
        %v796 = vadd.f32 %v477, %v795
        %v797 = vpop.f32.mrf.mxu0
        %798 = vmatprep.mubr.bf16.mxu0 0
        %799 = vmatmul.mubr.bf16.gmra.mxu0 %v714
        %v800 = vpop.f32.mrf.mxu0
        %v801 = vadd.f32 %v482, %v800
        %v802 = vpop.f32.mrf.mxu0
        %v803 = vpop.f32.mrf.mxu0
        %v804 = vadd.f32 %v487, %v803
        %v805 = vpop.f32.mrf.mxu0
        %806 = vmatprep.mubr.bf16.mxu0 0
        %807 = vmatmul.mubr.bf16.gmra.mxu0 %v717
        %v808 = vpop.f32.mrf.mxu0
        %v809 = vadd.f32 %v492, %v808
        %v810 = vpop.f32.mrf.mxu0
        %v811 = vpop.f32.mrf.mxu0
        %v812 = vadd.f32 %v497, %v811
        %v813 = vpop.f32.mrf.mxu0
        %814 = vmatprep.mubr.bf16.mxu0 0
        %815 = vmatmul.mubr.bf16.gmra.mxu0 %v720
        %v816 = vpop.f32.mrf.mxu0
        %v817 = vadd.f32 %v502, %v816
        %v818 = vpop.f32.mrf.mxu0
        %v819 = vpop.f32.mrf.mxu0
        %v820 = vadd.f32 %v507, %v819
        %v821 = vpop.f32.mrf.mxu0
        %822 = vmatprep.mubr.bf16.mxu0 0
        %823 = vmatmul.mubr.bf16.gmra.mxu0 %v723
        %v824 = vpop.f32.mrf.mxu0
        %v825 = vadd.f32 %v512, %v824
        %v826 = vpop.f32.mrf.mxu0
        %v827 = vpop.f32.mrf.mxu0
        %v828 = vadd.f32 %v517, %v827
        %v829 = vpop.f32.mrf.mxu0
        %830 = vmatprep.mubr.bf16.mxu0 0
        %831 = vmatmul.mubr.bf16.gmra.mxu0 %v726
        %v832 = vpop.f32.mrf.mxu0
        %v833 = vadd.f32 %v522, %v832
        %v834 = vpop.f32.mrf.mxu0
        %v835 = vpop.f32.mrf.mxu0
        %v836 = vadd.f32 %v527, %v835
        %v837 = vpop.f32.mrf.mxu0
        %838 = vmatprep.mubr.bf16.mxu0 0
        %839 = vmatmul.mubr.bf16.gmra.mxu0 %v729
        %v840 = vpop.f32.mrf.mxu0
        %v841 = vadd.f32 %v532, %v840
        %v842 = vpop.f32.mrf.mxu0
        %v843 = vpop.f32.mrf.mxu0
        %v844 = vadd.f32 %v537, %v843
        %v845 = vpop.f32.mrf.mxu0
        %846 = vmatprep.mubr.bf16.mxu0 0
        %847 = vmatmul.mubr.bf16.gmra.mxu0 %v732
        %v848 = vpop.f32.mrf.mxu0
        %v849 = vadd.f32 %v542, %v848
        %v850 = vpop.f32.mrf.mxu0
        %v851 = vpop.f32.mrf.mxu0
        %v852 = vadd.f32 %v547, %v851
        %v853 = vpop.f32.mrf.mxu0
        %854 = vmatprep.mubr.bf16.mxu0 0
        %855 = vmatmul.mubr.bf16.gmra.mxu0 %v735
        %v856 = vpop.f32.mrf.mxu0
        %v857 = vadd.f32 %v552, %v856
        %v858 = vpop.f32.mrf.mxu0
        %v859 = vpop.f32.mrf.mxu0
        %v860 = vadd.f32 %v557, %v859
        %v861 = vpop.f32.mrf.mxu0
        %862 = vmatprep.mubr.bf16.mxu0 0
        %863 = vmatmul.mubr.bf16.gmra.mxu0 %v738
        %v864 = vpop.f32.mrf.mxu0
        %v865 = vadd.f32 %v562, %v864
        %v866 = vpop.f32.mrf.mxu0
        %v867 = vpop.f32.mrf.mxu0
        %v868 = vadd.f32 %v567, %v867
        %v869 = vpop.f32.mrf.mxu0
        %870 = vmatprep.mubr.bf16.mxu0 0
        %871 = vmatmul.mubr.bf16.gmra.mxu0 %v741
        %v872 = vpop.f32.mrf.mxu0
        %v873 = vadd.f32 %v572, %v872
        %v874 = vpop.f32.mrf.mxu0
        %v875 = vpop.f32.mrf.mxu0
        %v876 = vadd.f32 %v577, %v875
        %v877 = vpop.f32.mrf.mxu0
        %878 = vmatprep.mubr.bf16.mxu0 0
        %879 = vmatmul.mubr.bf16.gmra.mxu0 %v744
        %v880 = vpop.f32.mrf.mxu0
        %v881 = vadd.f32 %v582, %v880
        %v882 = vpop.f32.mrf.mxu0
        %v883 = vpop.f32.mrf.mxu0
        %v884 = vadd.f32 %v587, %v883
        %v885 = vpop.f32.mrf.mxu0
        %886 = vmatprep.mubr.bf16.mxu0 0
        %887 = vmatmul.mubr.bf16.gmra.mxu0 %v747
        %v888 = vpop.f32.mrf.mxu0
        %v889 = vadd.f32 %v592, %v888
        %v890 = vpop.f32.mrf.mxu0
        %v891 = vpop.f32.mrf.mxu0
        %v892 = vadd.f32 %v597, %v891
        %v893 = vpop.f32.mrf.mxu0
        %894 = vmatprep.mubr.bf16.mxu0 0
        %895 = vmatmul.mubr.bf16.gmra.mxu0 %v750
        %v896 = vpop.f32.mrf.mxu0
        %v897 = vadd.f32 %v602, %v896
        %v898 = vpop.f32.mrf.mxu0
        %v899 = vpop.f32.mrf.mxu0
        %v900 = vadd.f32 %v607, %v899
        %v901 = vpop.f32.mrf.mxu0
        %902 = vmatprep.mubr.bf16.mxu0 0
        %903 = vmatmul.mubr.bf16.gmra.mxu0 %v753
        %v904 = vpop.f32.mrf.mxu0
        %v905 = vadd.f32 %v612, %v904
        %v906 = vpop.f32.mrf.mxu0
        %v907 = vpop.f32.mrf.mxu0
        %v908 = vadd.f32 %v617, %v907
        %v909 = vpop.f32.mrf.mxu0
        %910 = vmatprep.mubr.bf16.mxu0 0
        %911 = vmatmul.mubr.bf16.gmra.mxu0 %v756
        %v912 = vpop.f32.mrf.mxu0
        %v913 = vadd.f32 %v622, %v912
        %v914 = vpop.f32.mrf.mxu0
        %v915 = vpop.f32.mrf.mxu0
        %v916 = vadd.f32 %v627, %v915
        %v917 = vpop.f32.mrf.mxu0
        %918 = vdwg.mxu0
        %v919 = vtanh.pop %v793
        %v920 = vtanh.pop %v796
        %v921 = vtanh.pop %v801
        %v922 = vtanh.pop %v804
        %v923 = vtanh.pop %v809
        %v924 = vtanh.pop %v812
        %v925 = vtanh.pop %v817
        %v926 = vtanh.pop %v820
        %v927 = vtanh.pop %v825
        %v928 = vtanh.pop %v828
        %v929 = vtanh.pop %v833
        %v930 = vtanh.pop %v836
        %v931 = vtanh.pop %v841
        %v932 = vtanh.pop %v844
        %v933 = vtanh.pop %v849
        %v934 = vtanh.pop %v852
        %v935 = vtanh.pop %v857
        %v936 = vtanh.pop %v860
        %v937 = vtanh.pop %v865
        %v938 = vtanh.pop %v868
        %v939 = vtanh.pop %v873
        %v940 = vtanh.pop %v876
        %v941 = vtanh.pop %v881
        %v942 = vtanh.pop %v884
        %v943 = vtanh.pop %v889
        %v944 = vtanh.pop %v892
        %v945 = vtanh.pop %v897
        %v946 = vtanh.pop %v900
        %v947 = vtanh.pop %v905
        %v948 = vtanh.pop %v908
        %v949 = vtanh.pop %v913
        %v950 = vtanh.pop %v916
        %v952 = vlaneseq
        %v953 = vshrl.u32 %v952, 7
        %v954 = vsub.s32 0, %v953
        %v955 = vrot.slane %v374, %v954
        %v957 = vmul.f32 %v919, %v955
        %v958 = vmul.f32 %v920, %v955
        %v959 = vmul.f32 %v921, %v955
        %v960 = vmul.f32 %v922, %v955
        %v961 = vmul.f32 %v923, %v955
        %v962 = vmul.f32 %v924, %v955
        %v963 = vmul.f32 %v925, %v955
        %v964 = vmul.f32 %v926, %v955
        %v965 = vmul.f32 %v927, %v955
        %v966 = vmul.f32 %v928, %v955
        %v967 = vmul.f32 %v929, %v955
        %v968 = vmul.f32 %v930, %v955
        %v969 = vmul.f32 %v931, %v955
        %v970 = vmul.f32 %v932, %v955
        %v971 = vmul.f32 %v933, %v955
        %v972 = vmul.f32 %v934, %v955
        %v973 = vmul.f32 %v935, %v955
        %v974 = vmul.f32 %v936, %v955
        %v975 = vmul.f32 %v937, %v955
        %v976 = vmul.f32 %v938, %v955
        %v977 = vmul.f32 %v939, %v955
        %v978 = vmul.f32 %v940, %v955
        %v979 = vmul.f32 %v941, %v955
        %v980 = vmul.f32 %v942, %v955
        %v981 = vmul.f32 %v943, %v955
        %v982 = vmul.f32 %v944, %v955
        %v983 = vmul.f32 %v945, %v955
        %v984 = vmul.f32 %v946, %v955
        %v985 = vmul.f32 %v947, %v955
        %v986 = vmul.f32 %v948, %v955
        %v987 = vmul.f32 %v949, %v955
        %v988 = vmul.f32 %v950, %v955
        %v989 = vld [vmem:[%s4] sm:$0xff]
        %v990 = vld [vmem:[%s4 + $0x8] sm:$0xff]
        %v991 = vld [vmem:[%s4 + $0x10] sm:$0xff]
        %v992 = vld [vmem:[%s4 + $0x18] sm:$0xff]
        %v993 = vld [vmem:[%s4 + $0x20] sm:$0xff]
        %v994 = vld [vmem:[%s4 + $0x28] sm:$0xff]
        %v995 = vld [vmem:[%s4 + $0x30] sm:$0xff]
        %v996 = vld [vmem:[%s4 + $0x38] sm:$0xff]
        %v997 = vld [vmem:[%s5] sm:$0xff]
        %v998 = vld [vmem:[%s5 + $0x8] sm:$0xff]
        %v999 = vld [vmem:[%s5 + $0x10] sm:$0xff]
        %v1000 = vld [vmem:[%s5 + $0x18] sm:$0xff]
        %v1001 = vld [vmem:[%s5 + $0x20] sm:$0xff]
        %v1002 = vld [vmem:[%s5 + $0x28] sm:$0xff]
        %v1003 = vld [vmem:[%s5 + $0x30] sm:$0xff]
        %v1004 = vld [vmem:[%s5 + $0x38] sm:$0xff]
        %v1005 = vld [vmem:[%s6] sm:$0xff]
        %v1006 = vld [vmem:[%s6 + $0x8] sm:$0xff]
        %v1007 = vld [vmem:[%s6 + $0x10] sm:$0xff]
        %v1008 = vld [vmem:[%s6 + $0x18] sm:$0xff]
        %v1009 = vld [vmem:[%s6 + $0x20] sm:$0xff]
        %v1010 = vld [vmem:[%s6 + $0x28] sm:$0xff]
        %v1011 = vld [vmem:[%s6 + $0x30] sm:$0xff]
        %v1012 = vld [vmem:[%s6 + $0x38] sm:$0xff]
        %v1013 = vld [vmem:[%s6 + $0x40] sm:$0xff]
        %v1014 = vld [vmem:[%s6 + $0x48] sm:$0xff]
        %v1015 = vld [vmem:[%s6 + $0x50] sm:$0xff]
        %v1016 = vld [vmem:[%s6 + $0x58] sm:$0xff]
        %v1017 = vld [vmem:[%s6 + $0x60] sm:$0xff]
        %v1018 = vld [vmem:[%s6 + $0x68] sm:$0xff]
        %v1019 = vld [vmem:[%s6 + $0x70] sm:$0xff]
        %v1020 = vld [vmem:[%s6 + $0x78] sm:$0xff]
        %v1021 = vld [vmem:[%s6 + $0x80] sm:$0xff]
        %v1022 = vld [vmem:[%s6 + $0x88] sm:$0xff]
        %v1023 = vld [vmem:[%s6 + $0x90] sm:$0xff]
        %v1024 = vld [vmem:[%s6 + $0x98] sm:$0xff]
        %v1025 = vld [vmem:[%s6 + $0xa0] sm:$0xff]
        %v1026 = vld [vmem:[%s6 + $0xa8] sm:$0xff]
        %v1027 = vld [vmem:[%s6 + $0xb0] sm:$0xff]
        %v1028 = vld [vmem:[%s6 + $0xb8] sm:$0xff]
        %v1029 = vld [vmem:[%s7] sm:$0x1]
        %1030 = vrot.lane.b32.xlu0 %v957, 1
        %v1031 = vpop.permute.xlu0 %1030
        %1032 = vrot.lane.b32.xlu0 %v958, 1
        %v1033 = vpop.permute.xlu0 %1032
        %1034 = vrot.lane.b32.xlu0 %v959, 1
        %v1035 = vpop.permute.xlu0 %1034
        %1036 = vrot.lane.b32.xlu0 %v960, 1
        %v1037 = vpop.permute.xlu0 %1036
        %1038 = vrot.lane.b32.xlu0 %v961, 1
        %v1039 = vpop.permute.xlu0 %1038
        %1040 = vrot.lane.b32.xlu0 %v962, 1
        %v1041 = vpop.permute.xlu0 %1040
        %1042 = vrot.lane.b32.xlu0 %v963, 1
        %v1043 = vpop.permute.xlu0 %1042
        %1044 = vrot.lane.b32.xlu0 %v964, 1
        %v1045 = vpop.permute.xlu0 %1044
        %1046 = vrot.lane.b32.xlu0 %v957, 127
        %v1047 = vpop.permute.xlu0 %1046
        %1048 = vrot.lane.b32.xlu0 %v958, 127
        %v1049 = vpop.permute.xlu0 %1048
        %1050 = vrot.lane.b32.xlu0 %v959, 127
        %v1051 = vpop.permute.xlu0 %1050
        %1052 = vrot.lane.b32.xlu0 %v960, 127
        %v1053 = vpop.permute.xlu0 %1052
        %1054 = vrot.lane.b32.xlu0 %v961, 127
        %v1055 = vpop.permute.xlu0 %1054
        %1056 = vrot.lane.b32.xlu0 %v962, 127
        %v1057 = vpop.permute.xlu0 %1056
        %1058 = vrot.lane.b32.xlu0 %v963, 127
        %v1059 = vpop.permute.xlu0 %1058
        %1060 = vrot.lane.b32.xlu0 %v964, 127
        %v1061 = vpop.permute.xlu0 %1060
        %v1062 = vpack.c.bf16 %v1033, %v1031
        %v1063 = vpack.c.bf16 %v1037, %v1035
        %v1064 = vpack.c.bf16 %v1041, %v1039
        %v1065 = vpack.c.bf16 %v1045, %v1043
        %v1066 = vpack.c.bf16 %v958, %v957
        %v1067 = vpack.c.bf16 %v960, %v959
        %v1068 = vpack.c.bf16 %v962, %v961
        %v1069 = vpack.c.bf16 %v964, %v963
        %v1070 = vpack.c.bf16 %v1049, %v1047
        %v1071 = vpack.c.bf16 %v1053, %v1051
        %v1072 = vpack.c.bf16 %v1057, %v1055
        %v1073 = vpack.c.bf16 %v1061, %v1059
        %1075 = vset.pattern.permute.xlu0 0
        %1076 = vperm.xlu0 %1075, %v997
        %v1077 = vpop.permute.xlu0 %1076
        %1080 = vset.pattern.permute.xlu0 0
        %1081 = vperm.xlu0 %1080, %v998
        %v1082 = vpop.permute.xlu0 %1081
        %1085 = vset.pattern.permute.xlu0 0
        %1086 = vperm.xlu0 %1085, %v999
        %v1087 = vpop.permute.xlu0 %1086
        %1090 = vset.pattern.permute.xlu0 0
        %1091 = vperm.xlu0 %1090, %v1000
        %v1092 = vpop.permute.xlu0 %1091
        %1095 = vset.pattern.permute.xlu0 0
        %1096 = vperm.xlu0 %1095, %v1001
        %v1097 = vpop.permute.xlu0 %1096
        %1100 = vset.pattern.permute.xlu0 0
        %1101 = vperm.xlu0 %1100, %v1002
        %v1102 = vpop.permute.xlu0 %1101
        %1105 = vset.pattern.permute.xlu0 0
        %1106 = vperm.xlu0 %1105, %v1003
        %v1107 = vpop.permute.xlu0 %1106
        %1110 = vset.pattern.permute.xlu0 0
        %1111 = vperm.xlu0 %1110, %v1004
        %v1112 = vpop.permute.xlu0 %1111
        %v1122 = vunpack.c.l.b16 %v989
        %v1123 = vunpack.c.h.b16 %v989
        %v1124 = vunpack.c.l.b16 %v990
        %v1125 = vunpack.c.h.b16 %v990
        %v1126 = vunpack.c.l.b16 %v991
        %v1127 = vunpack.c.h.b16 %v991
        %v1128 = vunpack.c.l.b16 %v992
        %v1129 = vunpack.c.h.b16 %v992
        %v1130 = vunpack.c.l.b16 %v993
        %v1131 = vunpack.c.h.b16 %v993
        %v1132 = vunpack.c.l.b16 %v994
        %v1133 = vunpack.c.h.b16 %v994
        %v1134 = vunpack.c.l.b16 %v995
        %v1135 = vunpack.c.h.b16 %v995
        %v1136 = vunpack.c.l.b16 %v996
        %v1137 = vunpack.c.h.b16 %v996
        %v1138 = vpack.c.b16 %v1124, %v1122
        %v1139 = vpack.c.b16 %v1125, %v1123
        %v1140 = vpack.c.b16 %v1128, %v1126
        %v1141 = vpack.c.b16 %v1129, %v1127
        %v1142 = vpack.c.b16 %v1132, %v1130
        %v1143 = vpack.c.b16 %v1133, %v1131
        %v1144 = vpack.c.b16 %v1136, %v1134
        %v1145 = vpack.c.b16 %v1137, %v1135
        %vm1150 = vcmask 523264
        %v1152 = vsel %vm1150, %v1139, 0
        %v1155 = vsel %vm1150, %v1141, 0
        %v1158 = vsel %vm1150, %v1143, 0
        %v1161 = vsel %vm1150, %v1145, 0
        %1163 = vmatprep.subr.bf16.mxu0 0
        %1164 = vmatpush1.bf16.msra.mxu0 %v1069
        %1165 = vmatprep.subr.bf16.mxu0 0
        %1166 = vmatpush1.bf16.msra.mxu0 %v1068
        %1167 = vmatprep.subr.bf16.mxu0 0
        %1168 = vmatpush1.bf16.msra.mxu0 %v1067
        %1169 = vmatprep.subr.bf16.mxu0 0
        %1170 = vmatpush1.bf16.msra.mxu0 %v1066
        %1171 = vmatprep.subr.bf16.mxu0 0
        %1172 = vmatpush1.bf16.msra.mxu0 %v1065
        %1173 = vmatprep.subr.bf16.mxu0 0
        %1174 = vmatpush1.bf16.msra.mxu0 %v1064
        %1175 = vmatprep.subr.bf16.mxu0 0
        %1176 = vmatpush1.bf16.msra.mxu0 %v1063
        %1177 = vmatprep.subr.bf16.mxu0 0
        %1178 = vmatpush1.bf16.msra.mxu0 %v1062
        %1179 = vmatprep.subr.bf16.mxu0 0
        %1180 = vmatpush2.bf16.msra.mxu0 0
        %1181 = vmatprep.subr.bf16.mxu0 0
        %1182 = vmatpush2.bf16.msra.mxu0 0
        %1183 = vmatprep.subr.bf16.mxu0 0
        %1184 = vmatpush2.bf16.msra.mxu0 0
        %1185 = vmatprep.subr.bf16.mxu0 0
        %1186 = vmatpush2.bf16.msra.mxu0 0
        %1187 = vmatprep.subr.bf16.mxu0 0
        %1188 = vmatpush2.bf16.msra.mxu0 %v1073
        %1189 = vmatprep.subr.bf16.mxu0 0
        %1190 = vmatpush2.bf16.msra.mxu0 %v1072
        %1191 = vmatprep.subr.bf16.mxu0 0
        %1192 = vmatpush2.bf16.msra.mxu0 %v1071
        %1193 = vmatprep.subr.bf16.mxu0 0
        %1194 = vmatpush2.bf16.msra.mxu0 %v1070
        %1195 = vmatprep.mubr.bf16.mxu0 %v1152
        %1196 = vmatmul.mubr.bf16.gmra.mxu0 %v1138
        %v1197 = vpop.f32.mrf.mxu0
        %v1198 = vadd.f32 %v1077, %v1197
        %v1199 = vpop.f32.mrf.mxu0
        %v1200 = vpop.f32.mrf.mxu0
        %v1201 = vadd.f32 %v1082, %v1200
        %v1202 = vpop.f32.mrf.mxu0
        %1203 = vmatprep.mubr.bf16.mxu0 %v1155
        %1204 = vmatmul.mubr.bf16.gmra.mxu0 %v1140
        %v1205 = vpop.f32.mrf.mxu0
        %v1206 = vadd.f32 %v1087, %v1205
        %v1207 = vpop.f32.mrf.mxu0
        %v1208 = vpop.f32.mrf.mxu0
        %v1209 = vadd.f32 %v1092, %v1208
        %v1210 = vpop.f32.mrf.mxu0
        %1211 = vmatprep.mubr.bf16.mxu0 %v1158
        %1212 = vmatmul.mubr.bf16.gmra.mxu0 %v1142
        %v1213 = vpop.f32.mrf.mxu0
        %v1214 = vadd.f32 %v1097, %v1213
        %v1215 = vpop.f32.mrf.mxu0
        %v1216 = vpop.f32.mrf.mxu0
        %v1217 = vadd.f32 %v1102, %v1216
        %v1218 = vpop.f32.mrf.mxu0
        %1219 = vmatprep.mubr.bf16.mxu0 %v1161
        %1220 = vmatmul.mubr.bf16.gmra.mxu0 %v1144
        %v1221 = vpop.f32.mrf.mxu0
        %v1222 = vadd.f32 %v1107, %v1221
        %v1223 = vpop.f32.mrf.mxu0
        %v1224 = vpop.f32.mrf.mxu0
        %v1225 = vadd.f32 %v1112, %v1224
        %v1226 = vpop.f32.mrf.mxu0
        %1227 = vdwg.mxu0
        %v1228 = vtanh.pop %v1198
        %v1229 = vtanh.pop %v1201
        %v1230 = vtanh.pop %v1206
        %v1231 = vtanh.pop %v1209
        %v1232 = vtanh.pop %v1214
        %v1233 = vtanh.pop %v1217
        %v1234 = vtanh.pop %v1222
        %v1235 = vtanh.pop %v1225
        %v1236 = vadd.f32 %v1228, %v957
        %v1237 = vadd.f32 %v1229, %v958
        %v1238 = vadd.f32 %v1230, %v959
        %v1239 = vadd.f32 %v1231, %v960
        %v1240 = vadd.f32 %v1232, %v961
        %v1241 = vadd.f32 %v1233, %v962
        %v1242 = vadd.f32 %v1234, %v963
        %v1243 = vadd.f32 %v1235, %v964
        %v1244 = vmul.f32 %v1236, %v955
        %v1245 = vmul.f32 %v1237, %v955
        %v1246 = vmul.f32 %v1238, %v955
        %v1247 = vmul.f32 %v1239, %v955
        %v1248 = vmul.f32 %v1240, %v955
        %v1249 = vmul.f32 %v1241, %v955
        %v1250 = vmul.f32 %v1242, %v955
        %v1251 = vmul.f32 %v1243, %v955
        %1252 = vrot.lane.b32.xlu0 %v1244, 1
        %v1253 = vpop.permute.xlu0 %1252
        %1254 = vrot.lane.b32.xlu0 %v1245, 1
        %v1255 = vpop.permute.xlu0 %1254
        %1256 = vrot.lane.b32.xlu0 %v1246, 1
        %v1257 = vpop.permute.xlu0 %1256
        %1258 = vrot.lane.b32.xlu0 %v1247, 1
        %v1259 = vpop.permute.xlu0 %1258
        %1260 = vrot.lane.b32.xlu0 %v1248, 1
        %v1261 = vpop.permute.xlu0 %1260
        %1262 = vrot.lane.b32.xlu0 %v1249, 1
        %v1263 = vpop.permute.xlu0 %1262
        %1264 = vrot.lane.b32.xlu0 %v1250, 1
        %v1265 = vpop.permute.xlu0 %1264
        %1266 = vrot.lane.b32.xlu0 %v1251, 1
        %v1267 = vpop.permute.xlu0 %1266
        %1268 = vrot.lane.b32.xlu0 %v1244, 127
        %v1269 = vpop.permute.xlu0 %1268
        %1270 = vrot.lane.b32.xlu0 %v1245, 127
        %v1271 = vpop.permute.xlu0 %1270
        %1272 = vrot.lane.b32.xlu0 %v1246, 127
        %v1273 = vpop.permute.xlu0 %1272
        %1274 = vrot.lane.b32.xlu0 %v1247, 127
        %v1275 = vpop.permute.xlu0 %1274
        %1276 = vrot.lane.b32.xlu0 %v1248, 127
        %v1277 = vpop.permute.xlu0 %1276
        %1278 = vrot.lane.b32.xlu0 %v1249, 127
        %v1279 = vpop.permute.xlu0 %1278
        %1280 = vrot.lane.b32.xlu0 %v1250, 127
        %v1281 = vpop.permute.xlu0 %1280
        %1282 = vrot.lane.b32.xlu0 %v1251, 127
        %v1283 = vpop.permute.xlu0 %1282
        %1285 = vset.pattern.permute.xlu0 0
        %1286 = vperm.xlu0 %1285, %v1005
        %v1287 = vpop.permute.xlu0 %1286
        %1290 = vset.pattern.permute.xlu0 0
        %1291 = vperm.xlu0 %1290, %v1006
        %v1292 = vpop.permute.xlu0 %1291
        %1295 = vset.pattern.permute.xlu0 0
        %1296 = vperm.xlu0 %1295, %v1007
        %v1297 = vpop.permute.xlu0 %1296
        %1300 = vset.pattern.permute.xlu0 0
        %1301 = vperm.xlu0 %1300, %v1008
        %v1302 = vpop.permute.xlu0 %1301
        %1305 = vset.pattern.permute.xlu0 0
        %1306 = vperm.xlu0 %1305, %v1009
        %v1307 = vpop.permute.xlu0 %1306
        %1310 = vset.pattern.permute.xlu0 0
        %1311 = vperm.xlu0 %1310, %v1010
        %v1312 = vpop.permute.xlu0 %1311
        %1315 = vset.pattern.permute.xlu0 0
        %1316 = vperm.xlu0 %1315, %v1011
        %v1317 = vpop.permute.xlu0 %1316
        %1320 = vset.pattern.permute.xlu0 0
        %1321 = vperm.xlu0 %1320, %v1012
        %v1322 = vpop.permute.xlu0 %1321
        %1325 = vset.pattern.permute.xlu0 0
        %1326 = vperm.xlu0 %1325, %v1013
        %v1327 = vpop.permute.xlu0 %1326
        %1330 = vset.pattern.permute.xlu0 0
        %1331 = vperm.xlu0 %1330, %v1014
        %v1332 = vpop.permute.xlu0 %1331
        %1335 = vset.pattern.permute.xlu0 0
        %1336 = vperm.xlu0 %1335, %v1015
        %v1337 = vpop.permute.xlu0 %1336
        %1340 = vset.pattern.permute.xlu0 0
        %1341 = vperm.xlu0 %1340, %v1016
        %v1342 = vpop.permute.xlu0 %1341
        %1345 = vset.pattern.permute.xlu0 0
        %1346 = vperm.xlu0 %1345, %v1017
        %v1347 = vpop.permute.xlu0 %1346
        %1350 = vset.pattern.permute.xlu0 0
        %1351 = vperm.xlu0 %1350, %v1018
        %v1352 = vpop.permute.xlu0 %1351
        %1355 = vset.pattern.permute.xlu0 0
        %1356 = vperm.xlu0 %1355, %v1019
        %v1357 = vpop.permute.xlu0 %1356
        %1360 = vset.pattern.permute.xlu0 0
        %1361 = vperm.xlu0 %1360, %v1020
        %v1362 = vpop.permute.xlu0 %1361
        %1365 = vset.pattern.permute.xlu0 0
        %1366 = vperm.xlu0 %1365, %v1021
        %v1367 = vpop.permute.xlu0 %1366
        %1370 = vset.pattern.permute.xlu0 0
        %1371 = vperm.xlu0 %1370, %v1022
        %v1372 = vpop.permute.xlu0 %1371
        %1375 = vset.pattern.permute.xlu0 0
        %1376 = vperm.xlu0 %1375, %v1023
        %v1377 = vpop.permute.xlu0 %1376
        %1380 = vset.pattern.permute.xlu0 0
        %1381 = vperm.xlu0 %1380, %v1024
        %v1382 = vpop.permute.xlu0 %1381
        %1385 = vset.pattern.permute.xlu0 0
        %1386 = vperm.xlu0 %1385, %v1025
        %v1387 = vpop.permute.xlu0 %1386
        %1390 = vset.pattern.permute.xlu0 0
        %1391 = vperm.xlu0 %1390, %v1026
        %v1392 = vpop.permute.xlu0 %1391
        %1395 = vset.pattern.permute.xlu0 0
        %1396 = vperm.xlu0 %1395, %v1027
        %v1397 = vpop.permute.xlu0 %1396
        %1400 = vset.pattern.permute.xlu0 0
        %1401 = vperm.xlu0 %1400, %v1028
        %v1402 = vpop.permute.xlu0 %1401
        %v1404 = vmul.f32 %v1287, %v1253
        %v1405 = vmul.f32 %v1292, %v1255
        %v1406 = vmul.f32 %v1297, %v1257
        %v1407 = vmul.f32 %v1302, %v1259
        %v1408 = vmul.f32 %v1307, %v1261
        %v1409 = vmul.f32 %v1312, %v1263
        %v1410 = vmul.f32 %v1317, %v1265
        %v1411 = vmul.f32 %v1322, %v1267
        %v1412 = vmul.f32 %v1327, %v1244
        %v1413 = vmul.f32 %v1332, %v1245
        %v1414 = vmul.f32 %v1337, %v1246
        %v1415 = vmul.f32 %v1342, %v1247
        %v1416 = vmul.f32 %v1347, %v1248
        %v1417 = vmul.f32 %v1352, %v1249
        %v1418 = vmul.f32 %v1357, %v1250
        %v1419 = vmul.f32 %v1362, %v1251
        %v1420 = vmul.f32 %v1367, %v1269
        %v1421 = vmul.f32 %v1372, %v1271
        %v1422 = vmul.f32 %v1377, %v1273
        %v1423 = vmul.f32 %v1382, %v1275
        %v1424 = vmul.f32 %v1387, %v1277
        %v1425 = vmul.f32 %v1392, %v1279
        %v1426 = vmul.f32 %v1397, %v1281
        %v1427 = vmul.f32 %v1402, %v1283
        %v1428 = vadd.f32 %v1404, %v1405
        %v1429 = vadd.f32 %v1428, %v1406
        %v1430 = vadd.f32 %v1429, %v1407
        %v1431 = vadd.f32 %v1430, %v1408
        %v1432 = vadd.f32 %v1431, %v1409
        %v1433 = vadd.f32 %v1432, %v1410
        %v1434 = vadd.f32 %v1433, %v1411
        %v1435 = vadd.f32 %v1434, %v1412
        %v1436 = vadd.f32 %v1435, %v1413
        %v1437 = vadd.f32 %v1436, %v1414
        %v1438 = vadd.f32 %v1437, %v1415
        %v1439 = vadd.f32 %v1438, %v1416
        %v1440 = vadd.f32 %v1439, %v1417
        %v1441 = vadd.f32 %v1440, %v1418
        %v1442 = vadd.f32 %v1441, %v1419
        %v1443 = vadd.f32 %v1442, %v1420
        %v1444 = vadd.f32 %v1443, %v1421
        %v1445 = vadd.f32 %v1444, %v1422
        %v1446 = vadd.f32 %v1445, %v1423
        %v1447 = vadd.f32 %v1446, %v1424
        %v1448 = vadd.f32 %v1447, %v1425
        %v1449 = vadd.f32 %v1448, %v1426
        %v1450 = vadd.f32 %v1449, %v1427
        %v1451 = vrot.slane %v1450, 4
        %v1452 = vadd.f32 %v1450, %v1451
        %v1453 = vrot.slane %v1452, 2
        %v1454 = vadd.f32 %v1452, %v1453
        %v1455 = vrot.slane %v1454, 1
        %v1456 = vadd.f32 %v1454, %v1455
        %1458 = vset.pattern.permute.xlu0 0
        %1459 = vperm.xlu0 %1458, %v1029
        %v1460 = vpop.permute.xlu0 %1459
        %v1462 = vlaneseq
        %v1463 = vshrl.u32 %v1462, 7
        %v1464 = vsub.s32 0, %v1463
        %v1465 = vrot.slane %v1460, %v1464
        %v1466 = vadd.f32 %v1456, %v1465
        %v1467 = vtanh.pop %v1466
        %1468 = vst [vmem:[%s369] sm:$0x1] %v1467
        %v1469 = vld [vmem:[%s4 + $0x40] sm:$0xff]
        %v1470 = vld [vmem:[%s4 + $0x48] sm:$0xff]
        %v1471 = vld [vmem:[%s4 + $0x50] sm:$0xff]
        %v1472 = vld [vmem:[%s4 + $0x58] sm:$0xff]
        %v1473 = vld [vmem:[%s4 + $0x60] sm:$0xff]
        %v1474 = vld [vmem:[%s4 + $0x68] sm:$0xff]
        %v1475 = vld [vmem:[%s4 + $0x70] sm:$0xff]
        %v1476 = vld [vmem:[%s4 + $0x78] sm:$0xff]
        %v1477 = vld [vmem:[%s5 + $0x40] sm:$0xff]
        %v1478 = vld [vmem:[%s5 + $0x48] sm:$0xff]
        %v1479 = vld [vmem:[%s5 + $0x50] sm:$0xff]
        %v1480 = vld [vmem:[%s5 + $0x58] sm:$0xff]
        %v1481 = vld [vmem:[%s5 + $0x60] sm:$0xff]
        %v1482 = vld [vmem:[%s5 + $0x68] sm:$0xff]
        %v1483 = vld [vmem:[%s5 + $0x70] sm:$0xff]
        %v1484 = vld [vmem:[%s5 + $0x78] sm:$0xff]
        %s1485 = scalar_lea.vmem %s6, 192
        %v1486 = vld [vmem:[%s1485] sm:$0xff]
        %v1487 = vld [vmem:[%s1485 + $0x8] sm:$0xff]
        %v1488 = vld [vmem:[%s1485 + $0x10] sm:$0xff]
        %v1489 = vld [vmem:[%s1485 + $0x18] sm:$0xff]
        %v1490 = vld [vmem:[%s1485 + $0x20] sm:$0xff]
        %v1491 = vld [vmem:[%s1485 + $0x28] sm:$0xff]
        %v1492 = vld [vmem:[%s1485 + $0x30] sm:$0xff]
        %v1493 = vld [vmem:[%s1485 + $0x38] sm:$0xff]
        %v1494 = vld [vmem:[%s1485 + $0x40] sm:$0xff]
        %v1495 = vld [vmem:[%s1485 + $0x48] sm:$0xff]
        %v1496 = vld [vmem:[%s1485 + $0x50] sm:$0xff]
        %v1497 = vld [vmem:[%s1485 + $0x58] sm:$0xff]
        %v1498 = vld [vmem:[%s1485 + $0x60] sm:$0xff]
        %v1499 = vld [vmem:[%s1485 + $0x68] sm:$0xff]
        %v1500 = vld [vmem:[%s1485 + $0x70] sm:$0xff]
        %v1501 = vld [vmem:[%s1485 + $0x78] sm:$0xff]
        %v1502 = vld [vmem:[%s1485 + $0x80] sm:$0xff]
        %v1503 = vld [vmem:[%s1485 + $0x88] sm:$0xff]
        %v1504 = vld [vmem:[%s1485 + $0x90] sm:$0xff]
        %v1505 = vld [vmem:[%s1485 + $0x98] sm:$0xff]
        %v1506 = vld [vmem:[%s1485 + $0xa0] sm:$0xff]
        %v1507 = vld [vmem:[%s1485 + $0xa8] sm:$0xff]
        %v1508 = vld [vmem:[%s1485 + $0xb0] sm:$0xff]
        %v1509 = vld [vmem:[%s1485 + $0xb8] sm:$0xff]
        %s1510 = scalar_lea.vmem %s7, 1
        %v1511 = vld [vmem:[%s1510] sm:$0x1]
        %1512 = vrot.lane.b32.xlu0 %v965, 1
        %v1513 = vpop.permute.xlu0 %1512
        %1514 = vrot.lane.b32.xlu0 %v966, 1
        %v1515 = vpop.permute.xlu0 %1514
        %1516 = vrot.lane.b32.xlu0 %v967, 1
        %v1517 = vpop.permute.xlu0 %1516
        %1518 = vrot.lane.b32.xlu0 %v968, 1
        %v1519 = vpop.permute.xlu0 %1518
        %1520 = vrot.lane.b32.xlu0 %v969, 1
        %v1521 = vpop.permute.xlu0 %1520
        %1522 = vrot.lane.b32.xlu0 %v970, 1
        %v1523 = vpop.permute.xlu0 %1522
        %1524 = vrot.lane.b32.xlu0 %v971, 1
        %v1525 = vpop.permute.xlu0 %1524
        %1526 = vrot.lane.b32.xlu0 %v972, 1
        %v1527 = vpop.permute.xlu0 %1526
        %1528 = vrot.lane.b32.xlu0 %v965, 127
        %v1529 = vpop.permute.xlu0 %1528
        %1530 = vrot.lane.b32.xlu0 %v966, 127
        %v1531 = vpop.permute.xlu0 %1530
        %1532 = vrot.lane.b32.xlu0 %v967, 127
        %v1533 = vpop.permute.xlu0 %1532
        %1534 = vrot.lane.b32.xlu0 %v968, 127
        %v1535 = vpop.permute.xlu0 %1534
        %1536 = vrot.lane.b32.xlu0 %v969, 127
        %v1537 = vpop.permute.xlu0 %1536
        %1538 = vrot.lane.b32.xlu0 %v970, 127
        %v1539 = vpop.permute.xlu0 %1538
        %1540 = vrot.lane.b32.xlu0 %v971, 127
        %v1541 = vpop.permute.xlu0 %1540
        %1542 = vrot.lane.b32.xlu0 %v972, 127
        %v1543 = vpop.permute.xlu0 %1542
        %v1544 = vpack.c.bf16 %v1515, %v1513
        %v1545 = vpack.c.bf16 %v1519, %v1517
        %v1546 = vpack.c.bf16 %v1523, %v1521
        %v1547 = vpack.c.bf16 %v1527, %v1525
        %v1548 = vpack.c.bf16 %v966, %v965
        %v1549 = vpack.c.bf16 %v968, %v967
        %v1550 = vpack.c.bf16 %v970, %v969
        %v1551 = vpack.c.bf16 %v972, %v971
        %v1552 = vpack.c.bf16 %v1531, %v1529
        %v1553 = vpack.c.bf16 %v1535, %v1533
        %v1554 = vpack.c.bf16 %v1539, %v1537
        %v1555 = vpack.c.bf16 %v1543, %v1541
        %1557 = vset.pattern.permute.xlu0 0
        %1558 = vperm.xlu0 %1557, %v1477
        %v1559 = vpop.permute.xlu0 %1558
        %1562 = vset.pattern.permute.xlu0 0
        %1563 = vperm.xlu0 %1562, %v1478
        %v1564 = vpop.permute.xlu0 %1563
        %1567 = vset.pattern.permute.xlu0 0
        %1568 = vperm.xlu0 %1567, %v1479
        %v1569 = vpop.permute.xlu0 %1568
        %1572 = vset.pattern.permute.xlu0 0
        %1573 = vperm.xlu0 %1572, %v1480
        %v1574 = vpop.permute.xlu0 %1573
        %1577 = vset.pattern.permute.xlu0 0
        %1578 = vperm.xlu0 %1577, %v1481
        %v1579 = vpop.permute.xlu0 %1578
        %1582 = vset.pattern.permute.xlu0 0
        %1583 = vperm.xlu0 %1582, %v1482
        %v1584 = vpop.permute.xlu0 %1583
        %1587 = vset.pattern.permute.xlu0 0
        %1588 = vperm.xlu0 %1587, %v1483
        %v1589 = vpop.permute.xlu0 %1588
        %1592 = vset.pattern.permute.xlu0 0
        %1593 = vperm.xlu0 %1592, %v1484
        %v1594 = vpop.permute.xlu0 %1593
        %v1604 = vunpack.c.l.b16 %v1469
        %v1605 = vunpack.c.h.b16 %v1469
        %v1606 = vunpack.c.l.b16 %v1470
        %v1607 = vunpack.c.h.b16 %v1470
        %v1608 = vunpack.c.l.b16 %v1471
        %v1609 = vunpack.c.h.b16 %v1471
        %v1610 = vunpack.c.l.b16 %v1472
        %v1611 = vunpack.c.h.b16 %v1472
        %v1612 = vunpack.c.l.b16 %v1473
        %v1613 = vunpack.c.h.b16 %v1473
        %v1614 = vunpack.c.l.b16 %v1474
        %v1615 = vunpack.c.h.b16 %v1474
        %v1616 = vunpack.c.l.b16 %v1475
        %v1617 = vunpack.c.h.b16 %v1475
        %v1618 = vunpack.c.l.b16 %v1476
        %v1619 = vunpack.c.h.b16 %v1476
        %v1620 = vpack.c.b16 %v1606, %v1604
        %v1621 = vpack.c.b16 %v1607, %v1605
        %v1622 = vpack.c.b16 %v1610, %v1608
        %v1623 = vpack.c.b16 %v1611, %v1609
        %v1624 = vpack.c.b16 %v1614, %v1612
        %v1625 = vpack.c.b16 %v1615, %v1613
        %v1626 = vpack.c.b16 %v1618, %v1616
        %v1627 = vpack.c.b16 %v1619, %v1617
        %v1633 = vsel %vm1150, %v1621, 0
        %v1636 = vsel %vm1150, %v1623, 0
        %v1639 = vsel %vm1150, %v1625, 0
        %v1642 = vsel %vm1150, %v1627, 0
        %1644 = vmatprep.subr.bf16.mxu0 0
        %1645 = vmatpush1.bf16.msra.mxu0 %v1551
        %1646 = vmatprep.subr.bf16.mxu0 0
        %1647 = vmatpush1.bf16.msra.mxu0 %v1550
        %1648 = vmatprep.subr.bf16.mxu0 0
        %1649 = vmatpush1.bf16.msra.mxu0 %v1549
        %1650 = vmatprep.subr.bf16.mxu0 0
        %1651 = vmatpush1.bf16.msra.mxu0 %v1548
        %1652 = vmatprep.subr.bf16.mxu0 0
        %1653 = vmatpush1.bf16.msra.mxu0 %v1547
        %1654 = vmatprep.subr.bf16.mxu0 0
        %1655 = vmatpush1.bf16.msra.mxu0 %v1546
        %1656 = vmatprep.subr.bf16.mxu0 0
        %1657 = vmatpush1.bf16.msra.mxu0 %v1545
        %1658 = vmatprep.subr.bf16.mxu0 0
        %1659 = vmatpush1.bf16.msra.mxu0 %v1544
        %1660 = vmatprep.subr.bf16.mxu0 0
        %1661 = vmatpush2.bf16.msra.mxu0 0
        %1662 = vmatprep.subr.bf16.mxu0 0
        %1663 = vmatpush2.bf16.msra.mxu0 0
        %1664 = vmatprep.subr.bf16.mxu0 0
        %1665 = vmatpush2.bf16.msra.mxu0 0
        %1666 = vmatprep.subr.bf16.mxu0 0
        %1667 = vmatpush2.bf16.msra.mxu0 0
        %1668 = vmatprep.subr.bf16.mxu0 0
        %1669 = vmatpush2.bf16.msra.mxu0 %v1555
        %1670 = vmatprep.subr.bf16.mxu0 0
        %1671 = vmatpush2.bf16.msra.mxu0 %v1554
        %1672 = vmatprep.subr.bf16.mxu0 0
        %1673 = vmatpush2.bf16.msra.mxu0 %v1553
        %1674 = vmatprep.subr.bf16.mxu0 0
        %1675 = vmatpush2.bf16.msra.mxu0 %v1552
        %1676 = vmatprep.mubr.bf16.mxu0 %v1633
        %1677 = vmatmul.mubr.bf16.gmra.mxu0 %v1620
        %v1678 = vpop.f32.mrf.mxu0
        %v1679 = vadd.f32 %v1559, %v1678
        %v1680 = vpop.f32.mrf.mxu0
        %v1681 = vpop.f32.mrf.mxu0
        %v1682 = vadd.f32 %v1564, %v1681
        %v1683 = vpop.f32.mrf.mxu0
        %1684 = vmatprep.mubr.bf16.mxu0 %v1636
        %1685 = vmatmul.mubr.bf16.gmra.mxu0 %v1622
        %v1686 = vpop.f32.mrf.mxu0
        %v1687 = vadd.f32 %v1569, %v1686
        %v1688 = vpop.f32.mrf.mxu0
        %v1689 = vpop.f32.mrf.mxu0
        %v1690 = vadd.f32 %v1574, %v1689
        %v1691 = vpop.f32.mrf.mxu0
        %1692 = vmatprep.mubr.bf16.mxu0 %v1639
        %1693 = vmatmul.mubr.bf16.gmra.mxu0 %v1624
        %v1694 = vpop.f32.mrf.mxu0
        %v1695 = vadd.f32 %v1579, %v1694
        %v1696 = vpop.f32.mrf.mxu0
        %v1697 = vpop.f32.mrf.mxu0
        %v1698 = vadd.f32 %v1584, %v1697
        %v1699 = vpop.f32.mrf.mxu0
        %1700 = vmatprep.mubr.bf16.mxu0 %v1642
        %1701 = vmatmul.mubr.bf16.gmra.mxu0 %v1626
        %v1702 = vpop.f32.mrf.mxu0
        %v1703 = vadd.f32 %v1589, %v1702
        %v1704 = vpop.f32.mrf.mxu0
        %v1705 = vpop.f32.mrf.mxu0
        %v1706 = vadd.f32 %v1594, %v1705
        %v1707 = vpop.f32.mrf.mxu0
        %1708 = vdwg.mxu0
        %v1709 = vtanh.pop %v1679
        %v1710 = vtanh.pop %v1682
        %v1711 = vtanh.pop %v1687
        %v1712 = vtanh.pop %v1690
        %v1713 = vtanh.pop %v1695
        %v1714 = vtanh.pop %v1698
        %v1715 = vtanh.pop %v1703
        %v1716 = vtanh.pop %v1706
        %v1717 = vadd.f32 %v1709, %v965
        %v1718 = vadd.f32 %v1710, %v966
        %v1719 = vadd.f32 %v1711, %v967
        %v1720 = vadd.f32 %v1712, %v968
        %v1721 = vadd.f32 %v1713, %v969
        %v1722 = vadd.f32 %v1714, %v970
        %v1723 = vadd.f32 %v1715, %v971
        %v1724 = vadd.f32 %v1716, %v972
        %v1725 = vmul.f32 %v1717, %v955
        %v1726 = vmul.f32 %v1718, %v955
        %v1727 = vmul.f32 %v1719, %v955
        %v1728 = vmul.f32 %v1720, %v955
        %v1729 = vmul.f32 %v1721, %v955
        %v1730 = vmul.f32 %v1722, %v955
        %v1731 = vmul.f32 %v1723, %v955
        %v1732 = vmul.f32 %v1724, %v955
        %1733 = vrot.lane.b32.xlu0 %v1725, 1
        %v1734 = vpop.permute.xlu0 %1733
        %1735 = vrot.lane.b32.xlu0 %v1726, 1
        %v1736 = vpop.permute.xlu0 %1735
        %1737 = vrot.lane.b32.xlu0 %v1727, 1
        %v1738 = vpop.permute.xlu0 %1737
        %1739 = vrot.lane.b32.xlu0 %v1728, 1
        %v1740 = vpop.permute.xlu0 %1739
        %1741 = vrot.lane.b32.xlu0 %v1729, 1
        %v1742 = vpop.permute.xlu0 %1741
        %1743 = vrot.lane.b32.xlu0 %v1730, 1
        %v1744 = vpop.permute.xlu0 %1743
        %1745 = vrot.lane.b32.xlu0 %v1731, 1
        %v1746 = vpop.permute.xlu0 %1745
        %1747 = vrot.lane.b32.xlu0 %v1732, 1
        %v1748 = vpop.permute.xlu0 %1747
        %1749 = vrot.lane.b32.xlu0 %v1725, 127
        %v1750 = vpop.permute.xlu0 %1749
        %1751 = vrot.lane.b32.xlu0 %v1726, 127
        %v1752 = vpop.permute.xlu0 %1751
        %1753 = vrot.lane.b32.xlu0 %v1727, 127
        %v1754 = vpop.permute.xlu0 %1753
        %1755 = vrot.lane.b32.xlu0 %v1728, 127
        %v1756 = vpop.permute.xlu0 %1755
        %1757 = vrot.lane.b32.xlu0 %v1729, 127
        %v1758 = vpop.permute.xlu0 %1757
        %1759 = vrot.lane.b32.xlu0 %v1730, 127
        %v1760 = vpop.permute.xlu0 %1759
        %1761 = vrot.lane.b32.xlu0 %v1731, 127
        %v1762 = vpop.permute.xlu0 %1761
        %1763 = vrot.lane.b32.xlu0 %v1732, 127
        %v1764 = vpop.permute.xlu0 %1763
        %1766 = vset.pattern.permute.xlu0 0
        %1767 = vperm.xlu0 %1766, %v1486
        %v1768 = vpop.permute.xlu0 %1767
        %1771 = vset.pattern.permute.xlu0 0
        %1772 = vperm.xlu0 %1771, %v1487
        %v1773 = vpop.permute.xlu0 %1772
        %1776 = vset.pattern.permute.xlu0 0
        %1777 = vperm.xlu0 %1776, %v1488
        %v1778 = vpop.permute.xlu0 %1777
        %1781 = vset.pattern.permute.xlu0 0
        %1782 = vperm.xlu0 %1781, %v1489
        %v1783 = vpop.permute.xlu0 %1782
        %1786 = vset.pattern.permute.xlu0 0
        %1787 = vperm.xlu0 %1786, %v1490
        %v1788 = vpop.permute.xlu0 %1787
        %1791 = vset.pattern.permute.xlu0 0
        %1792 = vperm.xlu0 %1791, %v1491
        %v1793 = vpop.permute.xlu0 %1792
        %1796 = vset.pattern.permute.xlu0 0
        %1797 = vperm.xlu0 %1796, %v1492
        %v1798 = vpop.permute.xlu0 %1797
        %1801 = vset.pattern.permute.xlu0 0
        %1802 = vperm.xlu0 %1801, %v1493
        %v1803 = vpop.permute.xlu0 %1802
        %1806 = vset.pattern.permute.xlu0 0
        %1807 = vperm.xlu0 %1806, %v1494
        %v1808 = vpop.permute.xlu0 %1807
        %1811 = vset.pattern.permute.xlu0 0
        %1812 = vperm.xlu0 %1811, %v1495
        %v1813 = vpop.permute.xlu0 %1812
        %1816 = vset.pattern.permute.xlu0 0
        %1817 = vperm.xlu0 %1816, %v1496
        %v1818 = vpop.permute.xlu0 %1817
        %1821 = vset.pattern.permute.xlu0 0
        %1822 = vperm.xlu0 %1821, %v1497
        %v1823 = vpop.permute.xlu0 %1822
        %1826 = vset.pattern.permute.xlu0 0
        %1827 = vperm.xlu0 %1826, %v1498
        %v1828 = vpop.permute.xlu0 %1827
        %1831 = vset.pattern.permute.xlu0 0
        %1832 = vperm.xlu0 %1831, %v1499
        %v1833 = vpop.permute.xlu0 %1832
        %1836 = vset.pattern.permute.xlu0 0
        %1837 = vperm.xlu0 %1836, %v1500
        %v1838 = vpop.permute.xlu0 %1837
        %1841 = vset.pattern.permute.xlu0 0
        %1842 = vperm.xlu0 %1841, %v1501
        %v1843 = vpop.permute.xlu0 %1842
        %1846 = vset.pattern.permute.xlu0 0
        %1847 = vperm.xlu0 %1846, %v1502
        %v1848 = vpop.permute.xlu0 %1847
        %1851 = vset.pattern.permute.xlu0 0
        %1852 = vperm.xlu0 %1851, %v1503
        %v1853 = vpop.permute.xlu0 %1852
        %1856 = vset.pattern.permute.xlu0 0
        %1857 = vperm.xlu0 %1856, %v1504
        %v1858 = vpop.permute.xlu0 %1857
        %1861 = vset.pattern.permute.xlu0 0
        %1862 = vperm.xlu0 %1861, %v1505
        %v1863 = vpop.permute.xlu0 %1862
        %1866 = vset.pattern.permute.xlu0 0
        %1867 = vperm.xlu0 %1866, %v1506
        %v1868 = vpop.permute.xlu0 %1867
        %1871 = vset.pattern.permute.xlu0 0
        %1872 = vperm.xlu0 %1871, %v1507
        %v1873 = vpop.permute.xlu0 %1872
        %1876 = vset.pattern.permute.xlu0 0
        %1877 = vperm.xlu0 %1876, %v1508
        %v1878 = vpop.permute.xlu0 %1877
        %1881 = vset.pattern.permute.xlu0 0
        %1882 = vperm.xlu0 %1881, %v1509
        %v1883 = vpop.permute.xlu0 %1882
        %v1885 = vmul.f32 %v1768, %v1734
        %v1886 = vmul.f32 %v1773, %v1736
        %v1887 = vmul.f32 %v1778, %v1738
        %v1888 = vmul.f32 %v1783, %v1740
        %v1889 = vmul.f32 %v1788, %v1742
        %v1890 = vmul.f32 %v1793, %v1744
        %v1891 = vmul.f32 %v1798, %v1746
        %v1892 = vmul.f32 %v1803, %v1748
        %v1893 = vmul.f32 %v1808, %v1725
        %v1894 = vmul.f32 %v1813, %v1726
        %v1895 = vmul.f32 %v1818, %v1727
        %v1896 = vmul.f32 %v1823, %v1728
        %v1897 = vmul.f32 %v1828, %v1729
        %v1898 = vmul.f32 %v1833, %v1730
        %v1899 = vmul.f32 %v1838, %v1731
        %v1900 = vmul.f32 %v1843, %v1732
        %v1901 = vmul.f32 %v1848, %v1750
        %v1902 = vmul.f32 %v1853, %v1752
        %v1903 = vmul.f32 %v1858, %v1754
        %v1904 = vmul.f32 %v1863, %v1756
        %v1905 = vmul.f32 %v1868, %v1758
        %v1906 = vmul.f32 %v1873, %v1760
        %v1907 = vmul.f32 %v1878, %v1762
        %v1908 = vmul.f32 %v1883, %v1764
        %v1909 = vadd.f32 %v1885, %v1886
        %v1910 = vadd.f32 %v1909, %v1887
        %v1911 = vadd.f32 %v1910, %v1888
        %v1912 = vadd.f32 %v1911, %v1889
        %v1913 = vadd.f32 %v1912, %v1890
        %v1914 = vadd.f32 %v1913, %v1891
        %v1915 = vadd.f32 %v1914, %v1892
        %v1916 = vadd.f32 %v1915, %v1893
        %v1917 = vadd.f32 %v1916, %v1894
        %v1918 = vadd.f32 %v1917, %v1895
        %v1919 = vadd.f32 %v1918, %v1896
        %v1920 = vadd.f32 %v1919, %v1897
        %v1921 = vadd.f32 %v1920, %v1898
        %v1922 = vadd.f32 %v1921, %v1899
        %v1923 = vadd.f32 %v1922, %v1900
        %v1924 = vadd.f32 %v1923, %v1901
        %v1925 = vadd.f32 %v1924, %v1902
        %v1926 = vadd.f32 %v1925, %v1903
        %v1927 = vadd.f32 %v1926, %v1904
        %v1928 = vadd.f32 %v1927, %v1905
        %v1929 = vadd.f32 %v1928, %v1906
        %v1930 = vadd.f32 %v1929, %v1907
        %v1931 = vadd.f32 %v1930, %v1908
        %v1932 = vrot.slane %v1931, 4
        %v1933 = vadd.f32 %v1931, %v1932
        %v1934 = vrot.slane %v1933, 2
        %v1935 = vadd.f32 %v1933, %v1934
        %v1936 = vrot.slane %v1935, 1
        %v1937 = vadd.f32 %v1935, %v1936
        %1939 = vset.pattern.permute.xlu0 0
        %1940 = vperm.xlu0 %1939, %v1511
        %v1941 = vpop.permute.xlu0 %1940
        %v1943 = vlaneseq
        %v1944 = vshrl.u32 %v1943, 7
        %v1945 = vsub.s32 0, %v1944
        %v1946 = vrot.slane %v1941, %v1945
        %v1947 = vadd.f32 %v1937, %v1946
        %v1948 = vtanh.pop %v1947
        %1949 = vst [vmem:[%s369 + $0x1] sm:$0x1] %v1948
        %v1950 = vld [vmem:[%s4 + $0x80] sm:$0xff]
        %v1951 = vld [vmem:[%s4 + $0x88] sm:$0xff]
        %v1952 = vld [vmem:[%s4 + $0x90] sm:$0xff]
        %v1953 = vld [vmem:[%s4 + $0x98] sm:$0xff]
        %v1954 = vld [vmem:[%s4 + $0xa0] sm:$0xff]
        %v1955 = vld [vmem:[%s4 + $0xa8] sm:$0xff]
        %v1956 = vld [vmem:[%s4 + $0xb0] sm:$0xff]
        %v1957 = vld [vmem:[%s4 + $0xb8] sm:$0xff]
        %v1958 = vld [vmem:[%s5 + $0x80] sm:$0xff]
        %v1959 = vld [vmem:[%s5 + $0x88] sm:$0xff]
        %v1960 = vld [vmem:[%s5 + $0x90] sm:$0xff]
        %v1961 = vld [vmem:[%s5 + $0x98] sm:$0xff]
        %v1962 = vld [vmem:[%s5 + $0xa0] sm:$0xff]
        %v1963 = vld [vmem:[%s5 + $0xa8] sm:$0xff]
        %v1964 = vld [vmem:[%s5 + $0xb0] sm:$0xff]
        %v1965 = vld [vmem:[%s5 + $0xb8] sm:$0xff]
        %s1966 = scalar_lea.vmem %s6, 384
        %v1967 = vld [vmem:[%s1966] sm:$0xff]
        %v1968 = vld [vmem:[%s1966 + $0x8] sm:$0xff]
        %v1969 = vld [vmem:[%s1966 + $0x10] sm:$0xff]
        %v1970 = vld [vmem:[%s1966 + $0x18] sm:$0xff]
        %v1971 = vld [vmem:[%s1966 + $0x20] sm:$0xff]
        %v1972 = vld [vmem:[%s1966 + $0x28] sm:$0xff]
        %v1973 = vld [vmem:[%s1966 + $0x30] sm:$0xff]
        %v1974 = vld [vmem:[%s1966 + $0x38] sm:$0xff]
        %v1975 = vld [vmem:[%s1966 + $0x40] sm:$0xff]
        %v1976 = vld [vmem:[%s1966 + $0x48] sm:$0xff]
        %v1977 = vld [vmem:[%s1966 + $0x50] sm:$0xff]
        %v1978 = vld [vmem:[%s1966 + $0x58] sm:$0xff]
        %v1979 = vld [vmem:[%s1966 + $0x60] sm:$0xff]
        %v1980 = vld [vmem:[%s1966 + $0x68] sm:$0xff]
        %v1981 = vld [vmem:[%s1966 + $0x70] sm:$0xff]
        %v1982 = vld [vmem:[%s1966 + $0x78] sm:$0xff]
        %v1983 = vld [vmem:[%s1966 + $0x80] sm:$0xff]
        %v1984 = vld [vmem:[%s1966 + $0x88] sm:$0xff]
        %v1985 = vld [vmem:[%s1966 + $0x90] sm:$0xff]
        %v1986 = vld [vmem:[%s1966 + $0x98] sm:$0xff]
        %v1987 = vld [vmem:[%s1966 + $0xa0] sm:$0xff]
        %v1988 = vld [vmem:[%s1966 + $0xa8] sm:$0xff]
        %v1989 = vld [vmem:[%s1966 + $0xb0] sm:$0xff]
        %v1990 = vld [vmem:[%s1966 + $0xb8] sm:$0xff]
        %s1991 = scalar_lea.vmem %s7, 2
        %v1992 = vld [vmem:[%s1991] sm:$0x1]
        %1993 = vrot.lane.b32.xlu0 %v973, 1
        %v1994 = vpop.permute.xlu0 %1993
        %1995 = vrot.lane.b32.xlu0 %v974, 1
        %v1996 = vpop.permute.xlu0 %1995
        %1997 = vrot.lane.b32.xlu0 %v975, 1
        %v1998 = vpop.permute.xlu0 %1997
        %1999 = vrot.lane.b32.xlu0 %v976, 1
        %v2000 = vpop.permute.xlu0 %1999
        %2001 = vrot.lane.b32.xlu0 %v977, 1
        %v2002 = vpop.permute.xlu0 %2001
        %2003 = vrot.lane.b32.xlu0 %v978, 1
        %v2004 = vpop.permute.xlu0 %2003
        %2005 = vrot.lane.b32.xlu0 %v979, 1
        %v2006 = vpop.permute.xlu0 %2005
        %2007 = vrot.lane.b32.xlu0 %v980, 1
        %v2008 = vpop.permute.xlu0 %2007
        %2009 = vrot.lane.b32.xlu0 %v973, 127
        %v2010 = vpop.permute.xlu0 %2009
        %2011 = vrot.lane.b32.xlu0 %v974, 127
        %v2012 = vpop.permute.xlu0 %2011
        %2013 = vrot.lane.b32.xlu0 %v975, 127
        %v2014 = vpop.permute.xlu0 %2013
        %2015 = vrot.lane.b32.xlu0 %v976, 127
        %v2016 = vpop.permute.xlu0 %2015
        %2017 = vrot.lane.b32.xlu0 %v977, 127
        %v2018 = vpop.permute.xlu0 %2017
        %2019 = vrot.lane.b32.xlu0 %v978, 127
        %v2020 = vpop.permute.xlu0 %2019
        %2021 = vrot.lane.b32.xlu0 %v979, 127
        %v2022 = vpop.permute.xlu0 %2021
        %2023 = vrot.lane.b32.xlu0 %v980, 127
        %v2024 = vpop.permute.xlu0 %2023
        %v2025 = vpack.c.bf16 %v1996, %v1994
        %v2026 = vpack.c.bf16 %v2000, %v1998
        %v2027 = vpack.c.bf16 %v2004, %v2002
        %v2028 = vpack.c.bf16 %v2008, %v2006
        %v2029 = vpack.c.bf16 %v974, %v973
        %v2030 = vpack.c.bf16 %v976, %v975
        %v2031 = vpack.c.bf16 %v978, %v977
        %v2032 = vpack.c.bf16 %v980, %v979
        %v2033 = vpack.c.bf16 %v2012, %v2010
        %v2034 = vpack.c.bf16 %v2016, %v2014
        %v2035 = vpack.c.bf16 %v2020, %v2018
        %v2036 = vpack.c.bf16 %v2024, %v2022
        %2038 = vset.pattern.permute.xlu0 0
        %2039 = vperm.xlu0 %2038, %v1958
        %v2040 = vpop.permute.xlu0 %2039
        %2043 = vset.pattern.permute.xlu0 0
        %2044 = vperm.xlu0 %2043, %v1959
        %v2045 = vpop.permute.xlu0 %2044
        %2048 = vset.pattern.permute.xlu0 0
        %2049 = vperm.xlu0 %2048, %v1960
        %v2050 = vpop.permute.xlu0 %2049
        %2053 = vset.pattern.permute.xlu0 0
        %2054 = vperm.xlu0 %2053, %v1961
        %v2055 = vpop.permute.xlu0 %2054
        %2058 = vset.pattern.permute.xlu0 0
        %2059 = vperm.xlu0 %2058, %v1962
        %v2060 = vpop.permute.xlu0 %2059
        %2063 = vset.pattern.permute.xlu0 0
        %2064 = vperm.xlu0 %2063, %v1963
        %v2065 = vpop.permute.xlu0 %2064
        %2068 = vset.pattern.permute.xlu0 0
        %2069 = vperm.xlu0 %2068, %v1964
        %v2070 = vpop.permute.xlu0 %2069
        %2073 = vset.pattern.permute.xlu0 0
        %2074 = vperm.xlu0 %2073, %v1965
        %v2075 = vpop.permute.xlu0 %2074
        %v2085 = vunpack.c.l.b16 %v1950
        %v2086 = vunpack.c.h.b16 %v1950
        %v2087 = vunpack.c.l.b16 %v1951
        %v2088 = vunpack.c.h.b16 %v1951
        %v2089 = vunpack.c.l.b16 %v1952
        %v2090 = vunpack.c.h.b16 %v1952
        %v2091 = vunpack.c.l.b16 %v1953
        %v2092 = vunpack.c.h.b16 %v1953
        %v2093 = vunpack.c.l.b16 %v1954
        %v2094 = vunpack.c.h.b16 %v1954
        %v2095 = vunpack.c.l.b16 %v1955
        %v2096 = vunpack.c.h.b16 %v1955
        %v2097 = vunpack.c.l.b16 %v1956
        %v2098 = vunpack.c.h.b16 %v1956
        %v2099 = vunpack.c.l.b16 %v1957
        %v2100 = vunpack.c.h.b16 %v1957
        %v2101 = vpack.c.b16 %v2087, %v2085
        %v2102 = vpack.c.b16 %v2088, %v2086
        %v2103 = vpack.c.b16 %v2091, %v2089
        %v2104 = vpack.c.b16 %v2092, %v2090
        %v2105 = vpack.c.b16 %v2095, %v2093
        %v2106 = vpack.c.b16 %v2096, %v2094
        %v2107 = vpack.c.b16 %v2099, %v2097
        %v2108 = vpack.c.b16 %v2100, %v2098
        %v2114 = vsel %vm1150, %v2102, 0
        %v2117 = vsel %vm1150, %v2104, 0
        %v2120 = vsel %vm1150, %v2106, 0
        %v2123 = vsel %vm1150, %v2108, 0
        %2125 = vmatprep.subr.bf16.mxu0 0
        %2126 = vmatpush1.bf16.msra.mxu0 %v2032
        %2127 = vmatprep.subr.bf16.mxu0 0
        %2128 = vmatpush1.bf16.msra.mxu0 %v2031
        %2129 = vmatprep.subr.bf16.mxu0 0
        %2130 = vmatpush1.bf16.msra.mxu0 %v2030
        %2131 = vmatprep.subr.bf16.mxu0 0
        %2132 = vmatpush1.bf16.msra.mxu0 %v2029
        %2133 = vmatprep.subr.bf16.mxu0 0
        %2134 = vmatpush1.bf16.msra.mxu0 %v2028
        %2135 = vmatprep.subr.bf16.mxu0 0
        %2136 = vmatpush1.bf16.msra.mxu0 %v2027
        %2137 = vmatprep.subr.bf16.mxu0 0
        %2138 = vmatpush1.bf16.msra.mxu0 %v2026
        %2139 = vmatprep.subr.bf16.mxu0 0
        %2140 = vmatpush1.bf16.msra.mxu0 %v2025
        %2141 = vmatprep.subr.bf16.mxu0 0
        %2142 = vmatpush2.bf16.msra.mxu0 0
        %2143 = vmatprep.subr.bf16.mxu0 0
        %2144 = vmatpush2.bf16.msra.mxu0 0
        %2145 = vmatprep.subr.bf16.mxu0 0
        %2146 = vmatpush2.bf16.msra.mxu0 0
        %2147 = vmatprep.subr.bf16.mxu0 0
        %2148 = vmatpush2.bf16.msra.mxu0 0
        %2149 = vmatprep.subr.bf16.mxu0 0
        %2150 = vmatpush2.bf16.msra.mxu0 %v2036
        %2151 = vmatprep.subr.bf16.mxu0 0
        %2152 = vmatpush2.bf16.msra.mxu0 %v2035
        %2153 = vmatprep.subr.bf16.mxu0 0
        %2154 = vmatpush2.bf16.msra.mxu0 %v2034
        %2155 = vmatprep.subr.bf16.mxu0 0
        %2156 = vmatpush2.bf16.msra.mxu0 %v2033
        %2157 = vmatprep.mubr.bf16.mxu0 %v2114
        %2158 = vmatmul.mubr.bf16.gmra.mxu0 %v2101
        %v2159 = vpop.f32.mrf.mxu0
        %v2160 = vadd.f32 %v2040, %v2159
        %v2161 = vpop.f32.mrf.mxu0
        %v2162 = vpop.f32.mrf.mxu0
        %v2163 = vadd.f32 %v2045, %v2162
        %v2164 = vpop.f32.mrf.mxu0
        %2165 = vmatprep.mubr.bf16.mxu0 %v2117
        %2166 = vmatmul.mubr.bf16.gmra.mxu0 %v2103
        %v2167 = vpop.f32.mrf.mxu0
        %v2168 = vadd.f32 %v2050, %v2167
        %v2169 = vpop.f32.mrf.mxu0
        %v2170 = vpop.f32.mrf.mxu0
        %v2171 = vadd.f32 %v2055, %v2170
        %v2172 = vpop.f32.mrf.mxu0
        %2173 = vmatprep.mubr.bf16.mxu0 %v2120
        %2174 = vmatmul.mubr.bf16.gmra.mxu0 %v2105
        %v2175 = vpop.f32.mrf.mxu0
        %v2176 = vadd.f32 %v2060, %v2175
        %v2177 = vpop.f32.mrf.mxu0
        %v2178 = vpop.f32.mrf.mxu0
        %v2179 = vadd.f32 %v2065, %v2178
        %v2180 = vpop.f32.mrf.mxu0
        %2181 = vmatprep.mubr.bf16.mxu0 %v2123
        %2182 = vmatmul.mubr.bf16.gmra.mxu0 %v2107
        %v2183 = vpop.f32.mrf.mxu0
        %v2184 = vadd.f32 %v2070, %v2183
        %v2185 = vpop.f32.mrf.mxu0
        %v2186 = vpop.f32.mrf.mxu0
        %v2187 = vadd.f32 %v2075, %v2186
        %v2188 = vpop.f32.mrf.mxu0
        %2189 = vdwg.mxu0
        %v2190 = vtanh.pop %v2160
        %v2191 = vtanh.pop %v2163
        %v2192 = vtanh.pop %v2168
        %v2193 = vtanh.pop %v2171
        %v2194 = vtanh.pop %v2176
        %v2195 = vtanh.pop %v2179
        %v2196 = vtanh.pop %v2184
        %v2197 = vtanh.pop %v2187
        %v2198 = vadd.f32 %v2190, %v973
        %v2199 = vadd.f32 %v2191, %v974
        %v2200 = vadd.f32 %v2192, %v975
        %v2201 = vadd.f32 %v2193, %v976
        %v2202 = vadd.f32 %v2194, %v977
        %v2203 = vadd.f32 %v2195, %v978
        %v2204 = vadd.f32 %v2196, %v979
        %v2205 = vadd.f32 %v2197, %v980
        %v2206 = vmul.f32 %v2198, %v955
        %v2207 = vmul.f32 %v2199, %v955
        %v2208 = vmul.f32 %v2200, %v955
        %v2209 = vmul.f32 %v2201, %v955
        %v2210 = vmul.f32 %v2202, %v955
        %v2211 = vmul.f32 %v2203, %v955
        %v2212 = vmul.f32 %v2204, %v955
        %v2213 = vmul.f32 %v2205, %v955
        %2214 = vrot.lane.b32.xlu0 %v2206, 1
        %v2215 = vpop.permute.xlu0 %2214
        %2216 = vrot.lane.b32.xlu0 %v2207, 1
        %v2217 = vpop.permute.xlu0 %2216
        %2218 = vrot.lane.b32.xlu0 %v2208, 1
        %v2219 = vpop.permute.xlu0 %2218
        %2220 = vrot.lane.b32.xlu0 %v2209, 1
        %v2221 = vpop.permute.xlu0 %2220
        %2222 = vrot.lane.b32.xlu0 %v2210, 1
        %v2223 = vpop.permute.xlu0 %2222
        %2224 = vrot.lane.b32.xlu0 %v2211, 1
        %v2225 = vpop.permute.xlu0 %2224
        %2226 = vrot.lane.b32.xlu0 %v2212, 1
        %v2227 = vpop.permute.xlu0 %2226
        %2228 = vrot.lane.b32.xlu0 %v2213, 1
        %v2229 = vpop.permute.xlu0 %2228
        %2230 = vrot.lane.b32.xlu0 %v2206, 127
        %v2231 = vpop.permute.xlu0 %2230
        %2232 = vrot.lane.b32.xlu0 %v2207, 127
        %v2233 = vpop.permute.xlu0 %2232
        %2234 = vrot.lane.b32.xlu0 %v2208, 127
        %v2235 = vpop.permute.xlu0 %2234
        %2236 = vrot.lane.b32.xlu0 %v2209, 127
        %v2237 = vpop.permute.xlu0 %2236
        %2238 = vrot.lane.b32.xlu0 %v2210, 127
        %v2239 = vpop.permute.xlu0 %2238
        %2240 = vrot.lane.b32.xlu0 %v2211, 127
        %v2241 = vpop.permute.xlu0 %2240
        %2242 = vrot.lane.b32.xlu0 %v2212, 127
        %v2243 = vpop.permute.xlu0 %2242
        %2244 = vrot.lane.b32.xlu0 %v2213, 127
        %v2245 = vpop.permute.xlu0 %2244
        %2247 = vset.pattern.permute.xlu0 0
        %2248 = vperm.xlu0 %2247, %v1967
        %v2249 = vpop.permute.xlu0 %2248
        %2252 = vset.pattern.permute.xlu0 0
        %2253 = vperm.xlu0 %2252, %v1968
        %v2254 = vpop.permute.xlu0 %2253
        %2257 = vset.pattern.permute.xlu0 0
        %2258 = vperm.xlu0 %2257, %v1969
        %v2259 = vpop.permute.xlu0 %2258
        %2262 = vset.pattern.permute.xlu0 0
        %2263 = vperm.xlu0 %2262, %v1970
        %v2264 = vpop.permute.xlu0 %2263
        %2267 = vset.pattern.permute.xlu0 0
        %2268 = vperm.xlu0 %2267, %v1971
        %v2269 = vpop.permute.xlu0 %2268
        %2272 = vset.pattern.permute.xlu0 0
        %2273 = vperm.xlu0 %2272, %v1972
        %v2274 = vpop.permute.xlu0 %2273
        %2277 = vset.pattern.permute.xlu0 0
        %2278 = vperm.xlu0 %2277, %v1973
        %v2279 = vpop.permute.xlu0 %2278
        %2282 = vset.pattern.permute.xlu0 0
        %2283 = vperm.xlu0 %2282, %v1974
        %v2284 = vpop.permute.xlu0 %2283
        %2287 = vset.pattern.permute.xlu0 0
        %2288 = vperm.xlu0 %2287, %v1975
        %v2289 = vpop.permute.xlu0 %2288
        %2292 = vset.pattern.permute.xlu0 0
        %2293 = vperm.xlu0 %2292, %v1976
        %v2294 = vpop.permute.xlu0 %2293
        %2297 = vset.pattern.permute.xlu0 0
        %2298 = vperm.xlu0 %2297, %v1977
        %v2299 = vpop.permute.xlu0 %2298
        %2302 = vset.pattern.permute.xlu0 0
        %2303 = vperm.xlu0 %2302, %v1978
        %v2304 = vpop.permute.xlu0 %2303
        %2307 = vset.pattern.permute.xlu0 0
        %2308 = vperm.xlu0 %2307, %v1979
        %v2309 = vpop.permute.xlu0 %2308
        %2312 = vset.pattern.permute.xlu0 0
        %2313 = vperm.xlu0 %2312, %v1980
        %v2314 = vpop.permute.xlu0 %2313
        %2317 = vset.pattern.permute.xlu0 0
        %2318 = vperm.xlu0 %2317, %v1981
        %v2319 = vpop.permute.xlu0 %2318
        %2322 = vset.pattern.permute.xlu0 0
        %2323 = vperm.xlu0 %2322, %v1982
        %v2324 = vpop.permute.xlu0 %2323
        %2327 = vset.pattern.permute.xlu0 0
        %2328 = vperm.xlu0 %2327, %v1983
        %v2329 = vpop.permute.xlu0 %2328
        %2332 = vset.pattern.permute.xlu0 0
        %2333 = vperm.xlu0 %2332, %v1984
        %v2334 = vpop.permute.xlu0 %2333
        %2337 = vset.pattern.permute.xlu0 0
        %2338 = vperm.xlu0 %2337, %v1985
        %v2339 = vpop.permute.xlu0 %2338
        %2342 = vset.pattern.permute.xlu0 0
        %2343 = vperm.xlu0 %2342, %v1986
        %v2344 = vpop.permute.xlu0 %2343
        %2347 = vset.pattern.permute.xlu0 0
        %2348 = vperm.xlu0 %2347, %v1987
        %v2349 = vpop.permute.xlu0 %2348
        %2352 = vset.pattern.permute.xlu0 0
        %2353 = vperm.xlu0 %2352, %v1988
        %v2354 = vpop.permute.xlu0 %2353
        %2357 = vset.pattern.permute.xlu0 0
        %2358 = vperm.xlu0 %2357, %v1989
        %v2359 = vpop.permute.xlu0 %2358
        %2362 = vset.pattern.permute.xlu0 0
        %2363 = vperm.xlu0 %2362, %v1990
        %v2364 = vpop.permute.xlu0 %2363
        %v2366 = vmul.f32 %v2249, %v2215
        %v2367 = vmul.f32 %v2254, %v2217
        %v2368 = vmul.f32 %v2259, %v2219
        %v2369 = vmul.f32 %v2264, %v2221
        %v2370 = vmul.f32 %v2269, %v2223
        %v2371 = vmul.f32 %v2274, %v2225
        %v2372 = vmul.f32 %v2279, %v2227
        %v2373 = vmul.f32 %v2284, %v2229
        %v2374 = vmul.f32 %v2289, %v2206
        %v2375 = vmul.f32 %v2294, %v2207
        %v2376 = vmul.f32 %v2299, %v2208
        %v2377 = vmul.f32 %v2304, %v2209
        %v2378 = vmul.f32 %v2309, %v2210
        %v2379 = vmul.f32 %v2314, %v2211
        %v2380 = vmul.f32 %v2319, %v2212
        %v2381 = vmul.f32 %v2324, %v2213
        %v2382 = vmul.f32 %v2329, %v2231
        %v2383 = vmul.f32 %v2334, %v2233
        %v2384 = vmul.f32 %v2339, %v2235
        %v2385 = vmul.f32 %v2344, %v2237
        %v2386 = vmul.f32 %v2349, %v2239
        %v2387 = vmul.f32 %v2354, %v2241
        %v2388 = vmul.f32 %v2359, %v2243
        %v2389 = vmul.f32 %v2364, %v2245
        %v2390 = vadd.f32 %v2366, %v2367
        %v2391 = vadd.f32 %v2390, %v2368
        %v2392 = vadd.f32 %v2391, %v2369
        %v2393 = vadd.f32 %v2392, %v2370
        %v2394 = vadd.f32 %v2393, %v2371
        %v2395 = vadd.f32 %v2394, %v2372
        %v2396 = vadd.f32 %v2395, %v2373
        %v2397 = vadd.f32 %v2396, %v2374
        %v2398 = vadd.f32 %v2397, %v2375
        %v2399 = vadd.f32 %v2398, %v2376
        %v2400 = vadd.f32 %v2399, %v2377
        %v2401 = vadd.f32 %v2400, %v2378
        %v2402 = vadd.f32 %v2401, %v2379
        %v2403 = vadd.f32 %v2402, %v2380
        %v2404 = vadd.f32 %v2403, %v2381
        %v2405 = vadd.f32 %v2404, %v2382
        %v2406 = vadd.f32 %v2405, %v2383
        %v2407 = vadd.f32 %v2406, %v2384
        %v2408 = vadd.f32 %v2407, %v2385
        %v2409 = vadd.f32 %v2408, %v2386
        %v2410 = vadd.f32 %v2409, %v2387
        %v2411 = vadd.f32 %v2410, %v2388
        %v2412 = vadd.f32 %v2411, %v2389
        %v2413 = vrot.slane %v2412, 4
        %v2414 = vadd.f32 %v2412, %v2413
        %v2415 = vrot.slane %v2414, 2
        %v2416 = vadd.f32 %v2414, %v2415
        %v2417 = vrot.slane %v2416, 1
        %v2418 = vadd.f32 %v2416, %v2417
        %2420 = vset.pattern.permute.xlu0 0
        %2421 = vperm.xlu0 %2420, %v1992
        %v2422 = vpop.permute.xlu0 %2421
        %v2424 = vlaneseq
        %v2425 = vshrl.u32 %v2424, 7
        %v2426 = vsub.s32 0, %v2425
        %v2427 = vrot.slane %v2422, %v2426
        %v2428 = vadd.f32 %v2418, %v2427
        %v2429 = vtanh.pop %v2428
        %2430 = vst [vmem:[%s369 + $0x2] sm:$0x1] %v2429
        %v2431 = vld [vmem:[%s4 + $0xc0] sm:$0xff]
        %v2432 = vld [vmem:[%s4 + $0xc8] sm:$0xff]
        %v2433 = vld [vmem:[%s4 + $0xd0] sm:$0xff]
        %v2434 = vld [vmem:[%s4 + $0xd8] sm:$0xff]
        %v2435 = vld [vmem:[%s4 + $0xe0] sm:$0xff]
        %v2436 = vld [vmem:[%s4 + $0xe8] sm:$0xff]
        %v2437 = vld [vmem:[%s4 + $0xf0] sm:$0xff]
        %v2438 = vld [vmem:[%s4 + $0xf8] sm:$0xff]
        %v2439 = vld [vmem:[%s5 + $0xc0] sm:$0xff]
        %v2440 = vld [vmem:[%s5 + $0xc8] sm:$0xff]
        %v2441 = vld [vmem:[%s5 + $0xd0] sm:$0xff]
        %v2442 = vld [vmem:[%s5 + $0xd8] sm:$0xff]
        %v2443 = vld [vmem:[%s5 + $0xe0] sm:$0xff]
        %v2444 = vld [vmem:[%s5 + $0xe8] sm:$0xff]
        %v2445 = vld [vmem:[%s5 + $0xf0] sm:$0xff]
        %v2446 = vld [vmem:[%s5 + $0xf8] sm:$0xff]
        %s2447 = scalar_lea.vmem %s6, 576
        %v2448 = vld [vmem:[%s2447] sm:$0xff]
        %v2449 = vld [vmem:[%s2447 + $0x8] sm:$0xff]
        %v2450 = vld [vmem:[%s2447 + $0x10] sm:$0xff]
        %v2451 = vld [vmem:[%s2447 + $0x18] sm:$0xff]
        %v2452 = vld [vmem:[%s2447 + $0x20] sm:$0xff]
        %v2453 = vld [vmem:[%s2447 + $0x28] sm:$0xff]
        %v2454 = vld [vmem:[%s2447 + $0x30] sm:$0xff]
        %v2455 = vld [vmem:[%s2447 + $0x38] sm:$0xff]
        %v2456 = vld [vmem:[%s2447 + $0x40] sm:$0xff]
        %v2457 = vld [vmem:[%s2447 + $0x48] sm:$0xff]
        %v2458 = vld [vmem:[%s2447 + $0x50] sm:$0xff]
        %v2459 = vld [vmem:[%s2447 + $0x58] sm:$0xff]
        %v2460 = vld [vmem:[%s2447 + $0x60] sm:$0xff]
        %v2461 = vld [vmem:[%s2447 + $0x68] sm:$0xff]
        %v2462 = vld [vmem:[%s2447 + $0x70] sm:$0xff]
        %v2463 = vld [vmem:[%s2447 + $0x78] sm:$0xff]
        %v2464 = vld [vmem:[%s2447 + $0x80] sm:$0xff]
        %v2465 = vld [vmem:[%s2447 + $0x88] sm:$0xff]
        %v2466 = vld [vmem:[%s2447 + $0x90] sm:$0xff]
        %v2467 = vld [vmem:[%s2447 + $0x98] sm:$0xff]
        %v2468 = vld [vmem:[%s2447 + $0xa0] sm:$0xff]
        %v2469 = vld [vmem:[%s2447 + $0xa8] sm:$0xff]
        %v2470 = vld [vmem:[%s2447 + $0xb0] sm:$0xff]
        %v2471 = vld [vmem:[%s2447 + $0xb8] sm:$0xff]
        %s2472 = scalar_lea.vmem %s7, 3
        %v2473 = vld [vmem:[%s2472] sm:$0x1]
        %2474 = vrot.lane.b32.xlu0 %v981, 1
        %v2475 = vpop.permute.xlu0 %2474
        %2476 = vrot.lane.b32.xlu0 %v982, 1
        %v2477 = vpop.permute.xlu0 %2476
        %2478 = vrot.lane.b32.xlu0 %v983, 1
        %v2479 = vpop.permute.xlu0 %2478
        %2480 = vrot.lane.b32.xlu0 %v984, 1
        %v2481 = vpop.permute.xlu0 %2480
        %2482 = vrot.lane.b32.xlu0 %v985, 1
        %v2483 = vpop.permute.xlu0 %2482
        %2484 = vrot.lane.b32.xlu0 %v986, 1
        %v2485 = vpop.permute.xlu0 %2484
        %2486 = vrot.lane.b32.xlu0 %v987, 1
        %v2487 = vpop.permute.xlu0 %2486
        %2488 = vrot.lane.b32.xlu0 %v988, 1
        %v2489 = vpop.permute.xlu0 %2488
        %2490 = vrot.lane.b32.xlu0 %v981, 127
        %v2491 = vpop.permute.xlu0 %2490
        %2492 = vrot.lane.b32.xlu0 %v982, 127
        %v2493 = vpop.permute.xlu0 %2492
        %2494 = vrot.lane.b32.xlu0 %v983, 127
        %v2495 = vpop.permute.xlu0 %2494
        %2496 = vrot.lane.b32.xlu0 %v984, 127
        %v2497 = vpop.permute.xlu0 %2496
        %2498 = vrot.lane.b32.xlu0 %v985, 127
        %v2499 = vpop.permute.xlu0 %2498
        %2500 = vrot.lane.b32.xlu0 %v986, 127
        %v2501 = vpop.permute.xlu0 %2500
        %2502 = vrot.lane.b32.xlu0 %v987, 127
        %v2503 = vpop.permute.xlu0 %2502
        %2504 = vrot.lane.b32.xlu0 %v988, 127
        %v2505 = vpop.permute.xlu0 %2504
        %v2506 = vpack.c.bf16 %v2477, %v2475
        %v2507 = vpack.c.bf16 %v2481, %v2479
        %v2508 = vpack.c.bf16 %v2485, %v2483
        %v2509 = vpack.c.bf16 %v2489, %v2487
        %v2510 = vpack.c.bf16 %v982, %v981
        %v2511 = vpack.c.bf16 %v984, %v983
        %v2512 = vpack.c.bf16 %v986, %v985
        %v2513 = vpack.c.bf16 %v988, %v987
        %v2514 = vpack.c.bf16 %v2493, %v2491
        %v2515 = vpack.c.bf16 %v2497, %v2495
        %v2516 = vpack.c.bf16 %v2501, %v2499
        %v2517 = vpack.c.bf16 %v2505, %v2503
        %2519 = vset.pattern.permute.xlu0 0
        %2520 = vperm.xlu0 %2519, %v2439
        %v2521 = vpop.permute.xlu0 %2520
        %2524 = vset.pattern.permute.xlu0 0
        %2525 = vperm.xlu0 %2524, %v2440
        %v2526 = vpop.permute.xlu0 %2525
        %2529 = vset.pattern.permute.xlu0 0
        %2530 = vperm.xlu0 %2529, %v2441
        %v2531 = vpop.permute.xlu0 %2530
        %2534 = vset.pattern.permute.xlu0 0
        %2535 = vperm.xlu0 %2534, %v2442
        %v2536 = vpop.permute.xlu0 %2535
        %2539 = vset.pattern.permute.xlu0 0
        %2540 = vperm.xlu0 %2539, %v2443
        %v2541 = vpop.permute.xlu0 %2540
        %2544 = vset.pattern.permute.xlu0 0
        %2545 = vperm.xlu0 %2544, %v2444
        %v2546 = vpop.permute.xlu0 %2545
        %2549 = vset.pattern.permute.xlu0 0
        %2550 = vperm.xlu0 %2549, %v2445
        %v2551 = vpop.permute.xlu0 %2550
        %2554 = vset.pattern.permute.xlu0 0
        %2555 = vperm.xlu0 %2554, %v2446
        %v2556 = vpop.permute.xlu0 %2555
        %v2566 = vunpack.c.l.b16 %v2431
        %v2567 = vunpack.c.h.b16 %v2431
        %v2568 = vunpack.c.l.b16 %v2432
        %v2569 = vunpack.c.h.b16 %v2432
        %v2570 = vunpack.c.l.b16 %v2433
        %v2571 = vunpack.c.h.b16 %v2433
        %v2572 = vunpack.c.l.b16 %v2434
        %v2573 = vunpack.c.h.b16 %v2434
        %v2574 = vunpack.c.l.b16 %v2435
        %v2575 = vunpack.c.h.b16 %v2435
        %v2576 = vunpack.c.l.b16 %v2436
        %v2577 = vunpack.c.h.b16 %v2436
        %v2578 = vunpack.c.l.b16 %v2437
        %v2579 = vunpack.c.h.b16 %v2437
        %v2580 = vunpack.c.l.b16 %v2438
        %v2581 = vunpack.c.h.b16 %v2438
        %v2582 = vpack.c.b16 %v2568, %v2566
        %v2583 = vpack.c.b16 %v2569, %v2567
        %v2584 = vpack.c.b16 %v2572, %v2570
        %v2585 = vpack.c.b16 %v2573, %v2571
        %v2586 = vpack.c.b16 %v2576, %v2574
        %v2587 = vpack.c.b16 %v2577, %v2575
        %v2588 = vpack.c.b16 %v2580, %v2578
        %v2589 = vpack.c.b16 %v2581, %v2579
        %v2595 = vsel %vm1150, %v2583, 0
        %v2598 = vsel %vm1150, %v2585, 0
        %v2601 = vsel %vm1150, %v2587, 0
        %v2604 = vsel %vm1150, %v2589, 0
        %2606 = vmatprep.subr.bf16.mxu0 0
        %2607 = vmatpush1.bf16.msra.mxu0 %v2513
        %2608 = vmatprep.subr.bf16.mxu0 0
        %2609 = vmatpush1.bf16.msra.mxu0 %v2512
        %2610 = vmatprep.subr.bf16.mxu0 0
        %2611 = vmatpush1.bf16.msra.mxu0 %v2511
        %2612 = vmatprep.subr.bf16.mxu0 0
        %2613 = vmatpush1.bf16.msra.mxu0 %v2510
        %2614 = vmatprep.subr.bf16.mxu0 0
        %2615 = vmatpush1.bf16.msra.mxu0 %v2509
        %2616 = vmatprep.subr.bf16.mxu0 0
        %2617 = vmatpush1.bf16.msra.mxu0 %v2508
        %2618 = vmatprep.subr.bf16.mxu0 0
        %2619 = vmatpush1.bf16.msra.mxu0 %v2507
        %2620 = vmatprep.subr.bf16.mxu0 0
        %2621 = vmatpush1.bf16.msra.mxu0 %v2506
        %2622 = vmatprep.subr.bf16.mxu0 0
        %2623 = vmatpush2.bf16.msra.mxu0 0
        %2624 = vmatprep.subr.bf16.mxu0 0
        %2625 = vmatpush2.bf16.msra.mxu0 0
        %2626 = vmatprep.subr.bf16.mxu0 0
        %2627 = vmatpush2.bf16.msra.mxu0 0
        %2628 = vmatprep.subr.bf16.mxu0 0
        %2629 = vmatpush2.bf16.msra.mxu0 0
        %2630 = vmatprep.subr.bf16.mxu0 0
        %2631 = vmatpush2.bf16.msra.mxu0 %v2517
        %2632 = vmatprep.subr.bf16.mxu0 0
        %2633 = vmatpush2.bf16.msra.mxu0 %v2516
        %2634 = vmatprep.subr.bf16.mxu0 0
        %2635 = vmatpush2.bf16.msra.mxu0 %v2515
        %2636 = vmatprep.subr.bf16.mxu0 0
        %2637 = vmatpush2.bf16.msra.mxu0 %v2514
        %2638 = vmatprep.mubr.bf16.mxu0 %v2595
        %2639 = vmatmul.mubr.bf16.gmra.mxu0 %v2582
        %v2640 = vpop.f32.mrf.mxu0
        %v2641 = vadd.f32 %v2521, %v2640
        %v2642 = vpop.f32.mrf.mxu0
        %v2643 = vpop.f32.mrf.mxu0
        %v2644 = vadd.f32 %v2526, %v2643
        %v2645 = vpop.f32.mrf.mxu0
        %2646 = vmatprep.mubr.bf16.mxu0 %v2598
        %2647 = vmatmul.mubr.bf16.gmra.mxu0 %v2584
        %v2648 = vpop.f32.mrf.mxu0
        %v2649 = vadd.f32 %v2531, %v2648
        %v2650 = vpop.f32.mrf.mxu0
        %v2651 = vpop.f32.mrf.mxu0
        %v2652 = vadd.f32 %v2536, %v2651
        %v2653 = vpop.f32.mrf.mxu0
        %2654 = vmatprep.mubr.bf16.mxu0 %v2601
        %2655 = vmatmul.mubr.bf16.gmra.mxu0 %v2586
        %v2656 = vpop.f32.mrf.mxu0
        %v2657 = vadd.f32 %v2541, %v2656
        %v2658 = vpop.f32.mrf.mxu0
        %v2659 = vpop.f32.mrf.mxu0
        %v2660 = vadd.f32 %v2546, %v2659
        %v2661 = vpop.f32.mrf.mxu0
        %2662 = vmatprep.mubr.bf16.mxu0 %v2604
        %2663 = vmatmul.mubr.bf16.gmra.mxu0 %v2588
        %v2664 = vpop.f32.mrf.mxu0
        %v2665 = vadd.f32 %v2551, %v2664
        %v2666 = vpop.f32.mrf.mxu0
        %v2667 = vpop.f32.mrf.mxu0
        %v2668 = vadd.f32 %v2556, %v2667
        %v2669 = vpop.f32.mrf.mxu0
        %2670 = vdwg.mxu0
        %v2671 = vtanh.pop %v2641
        %v2672 = vtanh.pop %v2644
        %v2673 = vtanh.pop %v2649
        %v2674 = vtanh.pop %v2652
        %v2675 = vtanh.pop %v2657
        %v2676 = vtanh.pop %v2660
        %v2677 = vtanh.pop %v2665
        %v2678 = vtanh.pop %v2668
        %v2679 = vadd.f32 %v2671, %v981
        %v2680 = vadd.f32 %v2672, %v982
        %v2681 = vadd.f32 %v2673, %v983
        %v2682 = vadd.f32 %v2674, %v984
        %v2683 = vadd.f32 %v2675, %v985
        %v2684 = vadd.f32 %v2676, %v986
        %v2685 = vadd.f32 %v2677, %v987
        %v2686 = vadd.f32 %v2678, %v988
        %v2687 = vmul.f32 %v2679, %v955
        %v2688 = vmul.f32 %v2680, %v955
        %v2689 = vmul.f32 %v2681, %v955
        %v2690 = vmul.f32 %v2682, %v955
        %v2691 = vmul.f32 %v2683, %v955
        %v2692 = vmul.f32 %v2684, %v955
        %v2693 = vmul.f32 %v2685, %v955
        %v2694 = vmul.f32 %v2686, %v955
        %2695 = vrot.lane.b32.xlu0 %v2687, 1
        %v2696 = vpop.permute.xlu0 %2695
        %2697 = vrot.lane.b32.xlu0 %v2688, 1
        %v2698 = vpop.permute.xlu0 %2697
        %2699 = vrot.lane.b32.xlu0 %v2689, 1
        %v2700 = vpop.permute.xlu0 %2699
        %2701 = vrot.lane.b32.xlu0 %v2690, 1
        %v2702 = vpop.permute.xlu0 %2701
        %2703 = vrot.lane.b32.xlu0 %v2691, 1
        %v2704 = vpop.permute.xlu0 %2703
        %2705 = vrot.lane.b32.xlu0 %v2692, 1
        %v2706 = vpop.permute.xlu0 %2705
        %2707 = vrot.lane.b32.xlu0 %v2693, 1
        %v2708 = vpop.permute.xlu0 %2707
        %2709 = vrot.lane.b32.xlu0 %v2694, 1
        %v2710 = vpop.permute.xlu0 %2709
        %2711 = vrot.lane.b32.xlu0 %v2687, 127
        %v2712 = vpop.permute.xlu0 %2711
        %2713 = vrot.lane.b32.xlu0 %v2688, 127
        %v2714 = vpop.permute.xlu0 %2713
        %2715 = vrot.lane.b32.xlu0 %v2689, 127
        %v2716 = vpop.permute.xlu0 %2715
        %2717 = vrot.lane.b32.xlu0 %v2690, 127
        %v2718 = vpop.permute.xlu0 %2717
        %2719 = vrot.lane.b32.xlu0 %v2691, 127
        %v2720 = vpop.permute.xlu0 %2719
        %2721 = vrot.lane.b32.xlu0 %v2692, 127
        %v2722 = vpop.permute.xlu0 %2721
        %2723 = vrot.lane.b32.xlu0 %v2693, 127
        %v2724 = vpop.permute.xlu0 %2723
        %2725 = vrot.lane.b32.xlu0 %v2694, 127
        %v2726 = vpop.permute.xlu0 %2725
        %2728 = vset.pattern.permute.xlu0 0
        %2729 = vperm.xlu0 %2728, %v2448
        %v2730 = vpop.permute.xlu0 %2729
        %2733 = vset.pattern.permute.xlu0 0
        %2734 = vperm.xlu0 %2733, %v2449
        %v2735 = vpop.permute.xlu0 %2734
        %2738 = vset.pattern.permute.xlu0 0
        %2739 = vperm.xlu0 %2738, %v2450
        %v2740 = vpop.permute.xlu0 %2739
        %2743 = vset.pattern.permute.xlu0 0
        %2744 = vperm.xlu0 %2743, %v2451
        %v2745 = vpop.permute.xlu0 %2744
        %2748 = vset.pattern.permute.xlu0 0
        %2749 = vperm.xlu0 %2748, %v2452
        %v2750 = vpop.permute.xlu0 %2749
        %2753 = vset.pattern.permute.xlu0 0
        %2754 = vperm.xlu0 %2753, %v2453
        %v2755 = vpop.permute.xlu0 %2754
        %2758 = vset.pattern.permute.xlu0 0
        %2759 = vperm.xlu0 %2758, %v2454
        %v2760 = vpop.permute.xlu0 %2759
        %2763 = vset.pattern.permute.xlu0 0
        %2764 = vperm.xlu0 %2763, %v2455
        %v2765 = vpop.permute.xlu0 %2764
        %2768 = vset.pattern.permute.xlu0 0
        %2769 = vperm.xlu0 %2768, %v2456
        %v2770 = vpop.permute.xlu0 %2769
        %2773 = vset.pattern.permute.xlu0 0
        %2774 = vperm.xlu0 %2773, %v2457
        %v2775 = vpop.permute.xlu0 %2774
        %2778 = vset.pattern.permute.xlu0 0
        %2779 = vperm.xlu0 %2778, %v2458
        %v2780 = vpop.permute.xlu0 %2779
        %2783 = vset.pattern.permute.xlu0 0
        %2784 = vperm.xlu0 %2783, %v2459
        %v2785 = vpop.permute.xlu0 %2784
        %2788 = vset.pattern.permute.xlu0 0
        %2789 = vperm.xlu0 %2788, %v2460
        %v2790 = vpop.permute.xlu0 %2789
        %2793 = vset.pattern.permute.xlu0 0
        %2794 = vperm.xlu0 %2793, %v2461
        %v2795 = vpop.permute.xlu0 %2794
        %2798 = vset.pattern.permute.xlu0 0
        %2799 = vperm.xlu0 %2798, %v2462
        %v2800 = vpop.permute.xlu0 %2799
        %2803 = vset.pattern.permute.xlu0 0
        %2804 = vperm.xlu0 %2803, %v2463
        %v2805 = vpop.permute.xlu0 %2804
        %2808 = vset.pattern.permute.xlu0 0
        %2809 = vperm.xlu0 %2808, %v2464
        %v2810 = vpop.permute.xlu0 %2809
        %2813 = vset.pattern.permute.xlu0 0
        %2814 = vperm.xlu0 %2813, %v2465
        %v2815 = vpop.permute.xlu0 %2814
        %2818 = vset.pattern.permute.xlu0 0
        %2819 = vperm.xlu0 %2818, %v2466
        %v2820 = vpop.permute.xlu0 %2819
        %2823 = vset.pattern.permute.xlu0 0
        %2824 = vperm.xlu0 %2823, %v2467
        %v2825 = vpop.permute.xlu0 %2824
        %2828 = vset.pattern.permute.xlu0 0
        %2829 = vperm.xlu0 %2828, %v2468
        %v2830 = vpop.permute.xlu0 %2829
        %2833 = vset.pattern.permute.xlu0 0
        %2834 = vperm.xlu0 %2833, %v2469
        %v2835 = vpop.permute.xlu0 %2834
        %2838 = vset.pattern.permute.xlu0 0
        %2839 = vperm.xlu0 %2838, %v2470
        %v2840 = vpop.permute.xlu0 %2839
        %2843 = vset.pattern.permute.xlu0 0
        %2844 = vperm.xlu0 %2843, %v2471
        %v2845 = vpop.permute.xlu0 %2844
        %v2847 = vmul.f32 %v2730, %v2696
        %v2848 = vmul.f32 %v2735, %v2698
        %v2849 = vmul.f32 %v2740, %v2700
        %v2850 = vmul.f32 %v2745, %v2702
        %v2851 = vmul.f32 %v2750, %v2704
        %v2852 = vmul.f32 %v2755, %v2706
        %v2853 = vmul.f32 %v2760, %v2708
        %v2854 = vmul.f32 %v2765, %v2710
        %v2855 = vmul.f32 %v2770, %v2687
        %v2856 = vmul.f32 %v2775, %v2688
        %v2857 = vmul.f32 %v2780, %v2689
        %v2858 = vmul.f32 %v2785, %v2690
        %v2859 = vmul.f32 %v2790, %v2691
        %v2860 = vmul.f32 %v2795, %v2692
        %v2861 = vmul.f32 %v2800, %v2693
        %v2862 = vmul.f32 %v2805, %v2694
        %v2863 = vmul.f32 %v2810, %v2712
        %v2864 = vmul.f32 %v2815, %v2714
        %v2865 = vmul.f32 %v2820, %v2716
        %v2866 = vmul.f32 %v2825, %v2718
        %v2867 = vmul.f32 %v2830, %v2720
        %v2868 = vmul.f32 %v2835, %v2722
        %v2869 = vmul.f32 %v2840, %v2724
        %v2870 = vmul.f32 %v2845, %v2726
        %v2871 = vadd.f32 %v2847, %v2848
        %v2872 = vadd.f32 %v2871, %v2849
        %v2873 = vadd.f32 %v2872, %v2850
        %v2874 = vadd.f32 %v2873, %v2851
        %v2875 = vadd.f32 %v2874, %v2852
        %v2876 = vadd.f32 %v2875, %v2853
        %v2877 = vadd.f32 %v2876, %v2854
        %v2878 = vadd.f32 %v2877, %v2855
        %v2879 = vadd.f32 %v2878, %v2856
        %v2880 = vadd.f32 %v2879, %v2857
        %v2881 = vadd.f32 %v2880, %v2858
        %v2882 = vadd.f32 %v2881, %v2859
        %v2883 = vadd.f32 %v2882, %v2860
        %v2884 = vadd.f32 %v2883, %v2861
        %v2885 = vadd.f32 %v2884, %v2862
        %v2886 = vadd.f32 %v2885, %v2863
        %v2887 = vadd.f32 %v2886, %v2864
        %v2888 = vadd.f32 %v2887, %v2865
        %v2889 = vadd.f32 %v2888, %v2866
        %v2890 = vadd.f32 %v2889, %v2867
        %v2891 = vadd.f32 %v2890, %v2868
        %v2892 = vadd.f32 %v2891, %v2869
        %v2893 = vadd.f32 %v2892, %v2870
        %v2894 = vrot.slane %v2893, 4
        %v2895 = vadd.f32 %v2893, %v2894
        %v2896 = vrot.slane %v2895, 2
        %v2897 = vadd.f32 %v2895, %v2896
        %v2898 = vrot.slane %v2897, 1
        %v2899 = vadd.f32 %v2897, %v2898
        %2901 = vset.pattern.permute.xlu0 0
        %2902 = vperm.xlu0 %2901, %v2473
        %v2903 = vpop.permute.xlu0 %2902
        %v2905 = vlaneseq
        %v2906 = vshrl.u32 %v2905, 7
        %v2907 = vsub.s32 0, %v2906
        %v2908 = vrot.slane %v2903, %v2907
        %v2909 = vadd.f32 %v2899, %v2908
        %v2910 = vtanh.pop %v2909
        %2911 = vst [vmem:[%s369 + $0x3] sm:$0x1] %v2910
        %s2912 = sand.u32 %s208, 1
        %s2913 = scalar_lea.sflag [#allocation4], %s2912
        %s2914 = sand.u32 %s208, 1
        %s2915 = smul.addr %s2914, 4
        %s2916 = scalar_lea.vmem [#allocation3], %s2915
        // Predicated region
        $region94: #{tpu_custom_call.1} parent=88 // pred_check
          %p2917 = pneg %p218
        $region95: #{tpu_custom_call.1} parent=88 // pred_check_branch
          %2919 = sbr.rel (%p2917) target = $region97
        $region96: #{tpu_custom_call.1} parent=88 // pred_region
          %s2921 = ssub.s32 64, 64
          %2922 = vsyncadd %s2913, %s2921
          %s2923 = smul.addr %s22, 64
          %s2924 = scalar_lea.hbm %s8, %s2923
          %s2926 = sshll.u32 %s2916, 4
          %s2927 = int_to_ptr.vmem [resolvable:$true] %s2926
          %2929 = dma.vmem_to_hbm [thread:$0]  %s2927, 64, %s2924, %s2913
        $region97: #{tpu_custom_call.1} parent=88 // pred_fallthru
          _
      $region89: #{tpu_custom_call.1} parent=5 // pred_fallthru
        _
      %p2930 = scmp.le.s32.totalorder 2, %s17
      // Predicated region
      $region98: #{tpu_custom_call.1} parent=5 // pred_check
        %p2931 = pneg %p2930
      $region99: #{tpu_custom_call.1} parent=5 // pred_check_branch
        %2933 = sbr.rel (%p2931) target = $region101
      $region100: #{tpu_custom_call.1} parent=5 // pred_region
        %s2934 = ssub.s32 %s17, 2
        // Predicated region
        $region102: #{tpu_custom_call.1} parent=100 // pred_check
          %p2935 = pneg %p224
        $region103: #{tpu_custom_call.1} parent=100 // pred_check_branch
          %2937 = sbr.rel (%p2935) target = $region105
        $region104: #{tpu_custom_call.1} parent=100 // pred_region
          %s2938 = sand.u32 %s209, 1
          %s2939 = scalar_lea.sflag [#allocation4], %s2938
          %s2940 = sand.u32 %s209, 1
          %s2941 = smul.addr %s2940, 4
          %s2942 = scalar_lea.vmem [#allocation3], %s2941
          %2943 = dma.done %s2939, 64
        $region105: #{tpu_custom_call.1} parent=100 // pred_fallthru
          _
      $region101: #{tpu_custom_call.1} parent=5 // pred_fallthru
        _
    $region6: #{tpu_custom_call.1} parent=1 // loop_footer
      %s21 = sadd.s32 1, %s17
    $region7: #{tpu_custom_call.1} parent=1 // loop_footer_branch
      %16 = sbr.rel target = $region3
    $region8: #{tpu_custom_call.1} parent=1 // loop_exit
      _
    %2944 = vsyncpa [#allocation4], 1
    %s2945 = scalar_lea.sflag [#allocation4], 1
    %2946 = vsyncpa %s2945, 1

</llo_original>
